<compile_context>
chip_gen: v6e
topology: v6e:2x2x1
jax: 0.10.0
libtpu: 0.0.40
codegen_flags: <defaults>
</compile_context>

<pallas_src>
import jax
import jax.numpy as jnp
from jax import lax
from jax.experimental import pallas as pl
from jax.experimental.pallas import tpu as pltpu

INPUT_SIZE = 32
HIDDEN = 64
OUT_DIM = 2
LANE = 128       # vreg lane width: head output padded to a full lane tile
SUBLANE = 8      # vreg sublane count: batch padded to a multiple of this


def lstm_head_kernel(x_ref, wih_ref, whh_ref, b_ref, wout_ref, bout_ref,
                     out_ref, xw_sc):
    """Whole LSTM + Linear head in one invocation.

    x_ref    : (T*Bp, D)     time-major input, batch padded to sublane mult.
    wih_ref  : (D, 4H)       input->gate weights, i/f/o columns pre-scaled 0.5
    whh_ref  : (H, 4H)       hidden->gate weights, i/f/o columns pre-scaled 0.5
    b_ref    : (1, 4H)       combined bias (b_ih + b_hh), i/f/o pre-scaled 0.5
    wout_ref : (H, LANE)     Linear head padded to 128 lanes (real in [:, :2])
    bout_ref : (1, LANE)
    out_ref  : (Bp, LANE)    lane-dense head output (real data in [:B, :2])
    xw_sc    : (T*Bp, 4H)    VMEM scratch for the hoisted input projection
    """
    TB = x_ref.shape[0]
    Bp = out_ref.shape[0]
    T = TB // Bp
    H = whh_ref.shape[0]                       # 64

    # Prologue: input projection + bias for ALL timesteps in one MXU op.
    xw_sc[...] = (jnp.dot(x_ref[...], wih_ref[...],
                          preferred_element_type=jnp.float32)
                  + b_ref[...])

    h = jnp.zeros((Bp, H), jnp.float32)
    c = jnp.zeros((Bp, H), jnp.float32)

    # Statically unrolled recurrence (T is small and known at trace time).
    for t in range(T):
        gates = (xw_sc[t * Bp:(t + 1) * Bp, :]
                 + jnp.dot(h, whh_ref[...],
                           preferred_element_type=jnp.float32))   # (Bp, 4H)
        # Packed gate nonlinearities, 2 gates per 128-lane vreg, 1 tanh each.
        # i/f/o pre-activations were halved at init, so
        #   sigmoid(x) = 0.5 * tanh(x/2) + 0.5  needs a single EUP push.
        t_if = jnp.tanh(gates[:, 0:2 * H])        # [tanh(xi/2) | tanh(xf/2)]
        t_go = jnp.tanh(gates[:, 2 * H:4 * H])    # [tanh(xg)   | tanh(xo/2)]
        i_g = 0.5 * t_if[:, :H] + 0.5
        f_g = 0.5 * t_if[:, H:] + 0.5
        g_g = t_go[:, :H]
        o_g = 0.5 * t_go[:, H:] + 0.5
        c = f_g * c + i_g * g_g
        h = o_g * jnp.tanh(c)

    # Lane-dense (Bp, 128) head output; wrapper slices out the real (B, 2).
    out_ref[...] = (jnp.dot(h, wout_ref[...],
                            preferred_element_type=jnp.float32)
                    + bout_ref[...]).astype(out_ref.dtype)


def prepare_params(w_ih, w_hh, b, w_out, b_out):
    """One-time weight preparation (cache these; NOT on the per-call path).

    Scales the i/f/o gate columns by 0.5 (tanh-based sigmoid trick) and pads
    the Linear head to a lane-dense (H, 128) / (1, 128) layout.
    """
    H = w_hh.shape[0]
    col_scale = jnp.concatenate([
        jnp.full((H,), 0.5, jnp.float32),   # i
        jnp.full((H,), 0.5, jnp.float32),   # f
        jnp.ones((H,), jnp.float32),        # g (tanh gate, unscaled)
        jnp.full((H,), 0.5, jnp.float32),   # o
    ])
    w_ih_p = (w_ih.astype(jnp.float32) * col_scale[None, :])
    w_hh_p = (w_hh.astype(jnp.float32) * col_scale[None, :])
    b_p = (b.astype(jnp.float32) * col_scale).reshape(1, 4 * H)
    w_out_p = jnp.pad(w_out.astype(jnp.float32),
                      ((0, 0), (0, LANE - OUT_DIM)))               # (H, 128)
    b_out_p = jnp.pad(b_out.astype(jnp.float32),
                      (0, LANE - OUT_DIM)).reshape(1, LANE)        # (1, 128)
    return w_ih_p, w_hh_p, b_p, w_out_p, b_out_p


@jax.jit
def rnn_forward(x, w_ih_p, w_hh_p, b_p, w_out_p, b_out_p):
    """x: (B, T, D) batch-first, matching the PyTorch module.

    Prepared weights come from `prepare_params` (computed once at init).
    """
    B, T, D = x.shape
    H = w_hh_p.shape[0]
    Bp = ((B + SUBLANE - 1) // SUBLANE) * SUBLANE

    # Time-major, batch padded to a sublane multiple, flattened to (T*Bp, D).
    x_tm = jnp.transpose(x, (1, 0, 2)).astype(jnp.float32)        # (T, B, D)
    x_pad = jnp.pad(x_tm, ((0, 0), (0, Bp - B), (0, 0)))          # (T, Bp, D)
    x_flat = x_pad.reshape(T * Bp, D)

    out_pad = pl.pallas_call(
        lstm_head_kernel,
        out_shape=jax.ShapeDtypeStruct((Bp, LANE), jnp.float32),
        in_specs=[pl.BlockSpec(memory_space=pltpu.MemorySpace.VMEM)] * 6,
        out_specs=pl.BlockSpec(memory_space=pltpu.MemorySpace.VMEM),
        scratch_shapes=[pltpu.VMEM((T * Bp, 4 * H), jnp.float32)],
    )(x_flat, w_ih_p, w_hh_p, b_p, w_out_p, b_out_p)

    return out_pad[:B, :OUT_DIM]


def rnn_reference(x, w_ih, w_hh, b, w_out, b_out):
    """Pure-JAX reference (same gate order / math as PyTorch LSTM)."""
    B, T, D = x.shape
    H = w_hh.shape[0]

    def step(carry, x_t):
        h, c = carry
        gates = x_t @ w_ih + h @ w_hh + b
        i = jax.nn.sigmoid(gates[:, 0 * H:1 * H])
        f = jax.nn.sigmoid(gates[:, 1 * H:2 * H])
        g = jnp.tanh(gates[:, 2 * H:3 * H])
        o = jax.nn.sigmoid(gates[:, 3 * H:4 * H])
        c = f * c + i * g
        h = o * jnp.tanh(c)
        return (h, c), None

    h0 = jnp.zeros((B, H), jnp.float32)
    c0 = jnp.zeros((B, H), jnp.float32)
    (h_last, _), _ = lax.scan(step, (h0, c0), jnp.transpose(x, (1, 0, 2)))
    return h_last @ w_out + b_out


if __name__ == "__main__":
    key = jax.random.PRNGKey(0)
    B, T, D, H = 2, 8, INPUT_SIZE, HIDDEN

    # Deterministic parameter init, mirroring PyTorch's U(-1/sqrt(H), 1/sqrt(H)).
    k = 1.0 / jnp.sqrt(jnp.float32(H))
    keys = jax.random.split(key, 7)
    # Stored pre-transposed for right-multiplication: (D, 4H) / (H, 4H) / (H, 2).
    w_ih = jax.random.uniform(keys[0], (D, 4 * H), jnp.float32, -k, k)
    w_hh = jax.random.uniform(keys[1], (H, 4 * H), jnp.float32, -k, k)
    b_ih = jax.random.uniform(keys[2], (4 * H,), jnp.float32, -k, k)
    b_hh = jax.random.uniform(keys[3], (4 * H,), jnp.float32, -k, k)
    b = b_ih + b_hh
    w_out = jax.random.uniform(keys[4], (H, OUT_DIM), jnp.float32, -k, k)
    b_out = jax.random.uniform(keys[5], (OUT_DIM,), jnp.float32, -k, k)

    x = jax.random.normal(keys[6], (B, T, D), jnp.float32)

    # One-time weight prep (would live at model init in a real deployment).
    params = jax.block_until_ready(prepare_params(w_ih, w_hh, b, w_out, b_out))

    out = rnn_forward(x, *params)
    out = jax.block_until_ready(out)

    ref = rnn_reference(x, w_ih, w_hh, b, w_out, b_out)
    assert out.shape == (B, OUT_DIM)
    assert jnp.allclose(out, ref, atol=1e-5, rtol=1e-5), (out, ref)

    print("KERNEL_OK")
</pallas_src>

<mosaic_0001>
module attributes {stable_mosaic.version = 11 : i64} {
  func.func @lstm_head_kernel(%arg0: memref<64x32xf32, #tpu.memory_space<vmem>>, %arg1: memref<32x256xf32, #tpu.memory_space<vmem>>, %arg2: memref<64x256xf32, #tpu.memory_space<vmem>>, %arg3: memref<1x256xf32, #tpu.memory_space<vmem>>, %arg4: memref<64x128xf32, #tpu.memory_space<vmem>>, %arg5: memref<1x128xf32, #tpu.memory_space<vmem>>, %arg6: memref<8x128xf32, #tpu.memory_space<vmem>>, %arg7: memref<64x256xf32, #tpu.memory_space<vmem>>) attributes {dimension_semantics = [], scalar_prefetch = 0 : i64, scratch_operands = 1 : i64, tpu.core_type = #tpu.core_type<tc>} {
    %c0 = arith.constant 0 : index
    %c0_0 = arith.constant 0 : index
    %0 = vector.load %arg0[%c0, %c0_0] : memref<64x32xf32, #tpu.memory_space<vmem>>, vector<64x32xf32>
    %c0_1 = arith.constant 0 : index
    %c0_2 = arith.constant 0 : index
    %1 = vector.load %arg1[%c0_1, %c0_2] : memref<32x256xf32, #tpu.memory_space<vmem>>, vector<32x256xf32>
    %cst = arith.constant dense<0.000000e+00> : vector<64x256xf32>
    %2 = tpu.matmul %0, %1, %cst {dimension_numbers = #tpu.dot_dimension_numbers<[1], [0], [0], [1], [0, 0, 1, 1], [], []>} : vector<64x32xf32>, vector<32x256xf32>, vector<64x256xf32> -> vector<64x256xf32>
    %c0_3 = arith.constant 0 : index
    %c0_4 = arith.constant 0 : index
    %3 = vector.load %arg3[%c0_3, %c0_4] : memref<1x256xf32, #tpu.memory_space<vmem>>, vector<1x256xf32>
    %4 = vector.broadcast %3 : vector<1x256xf32> to vector<64x256xf32>
    %5 = arith.addf %2, %4 : vector<64x256xf32>
    %c0_5 = arith.constant 0 : index
    %c0_6 = arith.constant 0 : index
    %6 = vector.load %arg7[%c0_5, %c0_6] : memref<64x256xf32, #tpu.memory_space<vmem>>, vector<64x256xf32>
    tpu.vector_store %arg7[%c0_5, %c0_6], %5 {strides = array<i32>} : memref<64x256xf32, #tpu.memory_space<vmem>>, vector<64x256xf32>,
    %cst_7 = arith.constant 0.000000e+00 : f32
    %7 = vector.broadcast %cst_7 : f32 to vector<8x64xf32>
    %cst_8 = arith.constant 0.000000e+00 : f32
    %8 = vector.broadcast %cst_8 : f32 to vector<8x64xf32>
    %c0_9 = arith.constant 0 : index
    %c0_10 = arith.constant 0 : index
    %9 = vector.load %arg7[%c0_9, %c0_10] : memref<64x256xf32, #tpu.memory_space<vmem>>, vector<8x256xf32>
    %c0_11 = arith.constant 0 : index
    %c0_12 = arith.constant 0 : index
    %10 = vector.load %arg2[%c0_11, %c0_12] : memref<64x256xf32, #tpu.memory_space<vmem>>, vector<64x256xf32>
    %cst_13 = arith.constant dense<0.000000e+00> : vector<8x256xf32>
    %11 = tpu.matmul %7, %10, %cst_13 {dimension_numbers = #tpu.dot_dimension_numbers<[1], [0], [0], [1], [0, 0, 1, 1], [], []>} : vector<8x64xf32>, vector<64x256xf32>, vector<8x256xf32> -> vector<8x256xf32>
    %12 = arith.addf %9, %11 : vector<8x256xf32>
    %13 = vector.extract_strided_slice %12 {offsets = [0, 0], sizes = [8, 128], strides = [1, 1]} : vector<8x256xf32> to vector<8x128xf32>
    %14 = math.tanh %13 : vector<8x128xf32>
    %15 = vector.extract_strided_slice %12 {offsets = [0, 128], sizes = [8, 128], strides = [1, 1]} : vector<8x256xf32> to vector<8x128xf32>
    %16 = math.tanh %15 : vector<8x128xf32>
    %17 = vector.extract_strided_slice %14 {offsets = [0, 0], sizes = [8, 64], strides = [1, 1]} : vector<8x128xf32> to vector<8x64xf32>
    %cst_14 = arith.constant 5.000000e-01 : f32
    %18 = vector.broadcast %cst_14 : f32 to vector<8x64xf32>
    %19 = arith.mulf %18, %17 : vector<8x64xf32>
    %cst_15 = arith.constant 5.000000e-01 : f32
    %20 = vector.broadcast %cst_15 : f32 to vector<8x64xf32>
    %21 = arith.addf %19, %20 : vector<8x64xf32>
    %22 = vector.extract_strided_slice %14 {offsets = [0, 64], sizes = [8, 64], strides = [1, 1]} : vector<8x128xf32> to vector<8x64xf32>
    %cst_16 = arith.constant 5.000000e-01 : f32
    %23 = vector.broadcast %cst_16 : f32 to vector<8x64xf32>
    %24 = arith.mulf %23, %22 : vector<8x64xf32>
    %cst_17 = arith.constant 5.000000e-01 : f32
    %25 = vector.broadcast %cst_17 : f32 to vector<8x64xf32>
    %26 = arith.addf %24, %25 : vector<8x64xf32>
    %27 = vector.extract_strided_slice %16 {offsets = [0, 0], sizes = [8, 64], strides = [1, 1]} : vector<8x128xf32> to vector<8x64xf32>
    %28 = vector.extract_strided_slice %16 {offsets = [0, 64], sizes = [8, 64], strides = [1, 1]} : vector<8x128xf32> to vector<8x64xf32>
    %cst_18 = arith.constant 5.000000e-01 : f32
    %29 = vector.broadcast %cst_18 : f32 to vector<8x64xf32>
    %30 = arith.mulf %29, %28 : vector<8x64xf32>
    %cst_19 = arith.constant 5.000000e-01 : f32
    %31 = vector.broadcast %cst_19 : f32 to vector<8x64xf32>
    %32 = arith.addf %30, %31 : vector<8x64xf32>
    %33 = arith.mulf %26, %8 : vector<8x64xf32>
    %34 = arith.mulf %21, %27 : vector<8x64xf32>
    %35 = arith.addf %33, %34 : vector<8x64xf32>
    %36 = math.tanh %35 : vector<8x64xf32>
    %37 = arith.mulf %32, %36 : vector<8x64xf32>
    %c8 = arith.constant 8 : index
    %c0_20 = arith.constant 0 : index
    %38 = vector.load %arg7[%c8, %c0_20] : memref<64x256xf32, #tpu.memory_space<vmem>>, vector<8x256xf32>
    %c0_21 = arith.constant 0 : index
    %c0_22 = arith.constant 0 : index
    %39 = vector.load %arg2[%c0_21, %c0_22] : memref<64x256xf32, #tpu.memory_space<vmem>>, vector<64x256xf32>
    %cst_23 = arith.constant dense<0.000000e+00> : vector<8x256xf32>
    %40 = tpu.matmul %37, %39, %cst_23 {dimension_numbers = #tpu.dot_dimension_numbers<[1], [0], [0], [1], [0, 0, 1, 1], [], []>} : vector<8x64xf32>, vector<64x256xf32>, vector<8x256xf32> -> vector<8x256xf32>
    %41 = arith.addf %38, %40 : vector<8x256xf32>
    %42 = vector.extract_strided_slice %41 {offsets = [0, 0], sizes = [8, 128], strides = [1, 1]} : vector<8x256xf32> to vector<8x128xf32>
    %43 = math.tanh %42 : vector<8x128xf32>
    %44 = vector.extract_strided_slice %41 {offsets = [0, 128], sizes = [8, 128], strides = [1, 1]} : vector<8x256xf32> to vector<8x128xf32>
    %45 = math.tanh %44 : vector<8x128xf32>
    %46 = vector.extract_strided_slice %43 {offsets = [0, 0], sizes = [8, 64], strides = [1, 1]} : vector<8x128xf32> to vector<8x64xf32>
    %cst_24 = arith.constant 5.000000e-01 : f32
    %47 = vector.broadcast %cst_24 : f32 to vector<8x64xf32>
    %48 = arith.mulf %47, %46 : vector<8x64xf32>
    %cst_25 = arith.constant 5.000000e-01 : f32
    %49 = vector.broadcast %cst_25 : f32 to vector<8x64xf32>
    %50 = arith.addf %48, %49 : vector<8x64xf32>
    %51 = vector.extract_strided_slice %43 {offsets = [0, 64], sizes = [8, 64], strides = [1, 1]} : vector<8x128xf32> to vector<8x64xf32>
    %cst_26 = arith.constant 5.000000e-01 : f32
    %52 = vector.broadcast %cst_26 : f32 to vector<8x64xf32>
    %53 = arith.mulf %52, %51 : vector<8x64xf32>
    %cst_27 = arith.constant 5.000000e-01 : f32
    %54 = vector.broadcast %cst_27 : f32 to vector<8x64xf32>
    %55 = arith.addf %53, %54 : vector<8x64xf32>
    %56 = vector.extract_strided_slice %45 {offsets = [0, 0], sizes = [8, 64], strides = [1, 1]} : vector<8x128xf32> to vector<8x64xf32>
    %57 = vector.extract_strided_slice %45 {offsets = [0, 64], sizes = [8, 64], strides = [1, 1]} : vector<8x128xf32> to vector<8x64xf32>
    %cst_28 = arith.constant 5.000000e-01 : f32
    %58 = vector.broadcast %cst_28 : f32 to vector<8x64xf32>
    %59 = arith.mulf %58, %57 : vector<8x64xf32>
    %cst_29 = arith.constant 5.000000e-01 : f32
    %60 = vector.broadcast %cst_29 : f32 to vector<8x64xf32>
    %61 = arith.addf %59, %60 : vector<8x64xf32>
    %62 = arith.mulf %55, %35 : vector<8x64xf32>
    %63 = arith.mulf %50, %56 : vector<8x64xf32>
    %64 = arith.addf %62, %63 : vector<8x64xf32>
    %65 = math.tanh %64 : vector<8x64xf32>
    %66 = arith.mulf %61, %65 : vector<8x64xf32>
    %c16 = arith.constant 16 : index
    %c0_30 = arith.constant 0 : index
    %67 = vector.load %arg7[%c16, %c0_30] : memref<64x256xf32, #tpu.memory_space<vmem>>, vector<8x256xf32>
    %c0_31 = arith.constant 0 : index
    %c0_32 = arith.constant 0 : index
    %68 = vector.load %arg2[%c0_31, %c0_32] : memref<64x256xf32, #tpu.memory_space<vmem>>, vector<64x256xf32>
    %cst_33 = arith.constant dense<0.000000e+00> : vector<8x256xf32>
    %69 = tpu.matmul %66, %68, %cst_33 {dimension_numbers = #tpu.dot_dimension_numbers<[1], [0], [0], [1], [0, 0, 1, 1], [], []>} : vector<8x64xf32>, vector<64x256xf32>, vector<8x256xf32> -> vector<8x256xf32>
    %70 = arith.addf %67, %69 : vector<8x256xf32>
    %71 = vector.extract_strided_slice %70 {offsets = [0, 0], sizes = [8, 128], strides = [1, 1]} : vector<8x256xf32> to vector<8x128xf32>
    %72 = math.tanh %71 : vector<8x128xf32>
    %73 = vector.extract_strided_slice %70 {offsets = [0, 128], sizes = [8, 128], strides = [1, 1]} : vector<8x256xf32> to vector<8x128xf32>
    %74 = math.tanh %73 : vector<8x128xf32>
    %75 = vector.extract_strided_slice %72 {offsets = [0, 0], sizes = [8, 64], strides = [1, 1]} : vector<8x128xf32> to vector<8x64xf32>
    %cst_34 = arith.constant 5.000000e-01 : f32
    %76 = vector.broadcast %cst_34 : f32 to vector<8x64xf32>
    %77 = arith.mulf %76, %75 : vector<8x64xf32>
    %cst_35 = arith.constant 5.000000e-01 : f32
    %78 = vector.broadcast %cst_35 : f32 to vector<8x64xf32>
    %79 = arith.addf %77, %78 : vector<8x64xf32>
    %80 = vector.extract_strided_slice %72 {offsets = [0, 64], sizes = [8, 64], strides = [1, 1]} : vector<8x128xf32> to vector<8x64xf32>
    %cst_36 = arith.constant 5.000000e-01 : f32
    %81 = vector.broadcast %cst_36 : f32 to vector<8x64xf32>
    %82 = arith.mulf %81, %80 : vector<8x64xf32>
    %cst_37 = arith.constant 5.000000e-01 : f32
    %83 = vector.broadcast %cst_37 : f32 to vector<8x64xf32>
    %84 = arith.addf %82, %83 : vector<8x64xf32>
    %85 = vector.extract_strided_slice %74 {offsets = [0, 0], sizes = [8, 64], strides = [1, 1]} : vector<8x128xf32> to vector<8x64xf32>
    %86 = vector.extract_strided_slice %74 {offsets = [0, 64], sizes = [8, 64], strides = [1, 1]} : vector<8x128xf32> to vector<8x64xf32>
    %cst_38 = arith.constant 5.000000e-01 : f32
    %87 = vector.broadcast %cst_38 : f32 to vector<8x64xf32>
    %88 = arith.mulf %87, %86 : vector<8x64xf32>
    %cst_39 = arith.constant 5.000000e-01 : f32
    %89 = vector.broadcast %cst_39 : f32 to vector<8x64xf32>
    %90 = arith.addf %88, %89 : vector<8x64xf32>
    %91 = arith.mulf %84, %64 : vector<8x64xf32>
    %92 = arith.mulf %79, %85 : vector<8x64xf32>
    %93 = arith.addf %91, %92 : vector<8x64xf32>
    %94 = math.tanh %93 : vector<8x64xf32>
    %95 = arith.mulf %90, %94 : vector<8x64xf32>
    %c24 = arith.constant 24 : index
    %c0_40 = arith.constant 0 : index
    %96 = vector.load %arg7[%c24, %c0_40] : memref<64x256xf32, #tpu.memory_space<vmem>>, vector<8x256xf32>
    %c0_41 = arith.constant 0 : index
    %c0_42 = arith.constant 0 : index
    %97 = vector.load %arg2[%c0_41, %c0_42] : memref<64x256xf32, #tpu.memory_space<vmem>>, vector<64x256xf32>
    %cst_43 = arith.constant dense<0.000000e+00> : vector<8x256xf32>
    %98 = tpu.matmul %95, %97, %cst_43 {dimension_numbers = #tpu.dot_dimension_numbers<[1], [0], [0], [1], [0, 0, 1, 1], [], []>} : vector<8x64xf32>, vector<64x256xf32>, vector<8x256xf32> -> vector<8x256xf32>
    %99 = arith.addf %96, %98 : vector<8x256xf32>
    %100 = vector.extract_strided_slice %99 {offsets = [0, 0], sizes = [8, 128], strides = [1, 1]} : vector<8x256xf32> to vector<8x128xf32>
    %101 = math.tanh %100 : vector<8x128xf32>
    %102 = vector.extract_strided_slice %99 {offsets = [0, 128], sizes = [8, 128], strides = [1, 1]} : vector<8x256xf32> to vector<8x128xf32>
    %103 = math.tanh %102 : vector<8x128xf32>
    %104 = vector.extract_strided_slice %101 {offsets = [0, 0], sizes = [8, 64], strides = [1, 1]} : vector<8x128xf32> to vector<8x64xf32>
    %cst_44 = arith.constant 5.000000e-01 : f32
    %105 = vector.broadcast %cst_44 : f32 to vector<8x64xf32>
    %106 = arith.mulf %105, %104 : vector<8x64xf32>
    %cst_45 = arith.constant 5.000000e-01 : f32
    %107 = vector.broadcast %cst_45 : f32 to vector<8x64xf32>
    %108 = arith.addf %106, %107 : vector<8x64xf32>
    %109 = vector.extract_strided_slice %101 {offsets = [0, 64], sizes = [8, 64], strides = [1, 1]} : vector<8x128xf32> to vector<8x64xf32>
    %cst_46 = arith.constant 5.000000e-01 : f32
    %110 = vector.broadcast %cst_46 : f32 to vector<8x64xf32>
    %111 = arith.mulf %110, %109 : vector<8x64xf32>
    %cst_47 = arith.constant 5.000000e-01 : f32
    %112 = vector.broadcast %cst_47 : f32 to vector<8x64xf32>
    %113 = arith.addf %111, %112 : vector<8x64xf32>
    %114 = vector.extract_strided_slice %103 {offsets = [0, 0], sizes = [8, 64], strides = [1, 1]} : vector<8x128xf32> to vector<8x64xf32>
    %115 = vector.extract_strided_slice %103 {offsets = [0, 64], sizes = [8, 64], strides = [1, 1]} : vector<8x128xf32> to vector<8x64xf32>
    %cst_48 = arith.constant 5.000000e-01 : f32
    %116 = vector.broadcast %cst_48 : f32 to vector<8x64xf32>
    %117 = arith.mulf %116, %115 : vector<8x64xf32>
    %cst_49 = arith.constant 5.000000e-01 : f32
    %118 = vector.broadcast %cst_49 : f32 to vector<8x64xf32>
    %119 = arith.addf %117, %118 : vector<8x64xf32>
    %120 = arith.mulf %113, %93 : vector<8x64xf32>
    %121 = arith.mulf %108, %114 : vector<8x64xf32>
    %122 = arith.addf %120, %121 : vector<8x64xf32>
    %123 = math.tanh %122 : vector<8x64xf32>
    %124 = arith.mulf %119, %123 : vector<8x64xf32>
    %c32 = arith.constant 32 : index
    %c0_50 = arith.constant 0 : index
    %125 = vector.load %arg7[%c32, %c0_50] : memref<64x256xf32, #tpu.memory_space<vmem>>, vector<8x256xf32>
    %c0_51 = arith.constant 0 : index
    %c0_52 = arith.constant 0 : index
    %126 = vector.load %arg2[%c0_51, %c0_52] : memref<64x256xf32, #tpu.memory_space<vmem>>, vector<64x256xf32>
    %cst_53 = arith.constant dense<0.000000e+00> : vector<8x256xf32>
    %127 = tpu.matmul %124, %126, %cst_53 {dimension_numbers = #tpu.dot_dimension_numbers<[1], [0], [0], [1], [0, 0, 1, 1], [], []>} : vector<8x64xf32>, vector<64x256xf32>, vector<8x256xf32> -> vector<8x256xf32>
    %128 = arith.addf %125, %127 : vector<8x256xf32>
    %129 = vector.extract_strided_slice %128 {offsets = [0, 0], sizes = [8, 128], strides = [1, 1]} : vector<8x256xf32> to vector<8x128xf32>
    %130 = math.tanh %129 : vector<8x128xf32>
    %131 = vector.extract_strided_slice %128 {offsets = [0, 128], sizes = [8, 128], strides = [1, 1]} : vector<8x256xf32> to vector<8x128xf32>
    %132 = math.tanh %131 : vector<8x128xf32>
    %133 = vector.extract_strided_slice %130 {offsets = [0, 0], sizes = [8, 64], strides = [1, 1]} : vector<8x128xf32> to vector<8x64xf32>
    %cst_54 = arith.constant 5.000000e-01 : f32
    %134 = vector.broadcast %cst_54 : f32 to vector<8x64xf32>
    %135 = arith.mulf %134, %133 : vector<8x64xf32>
    %cst_55 = arith.constant 5.000000e-01 : f32
    %136 = vector.broadcast %cst_55 : f32 to vector<8x64xf32>
    %137 = arith.addf %135, %136 : vector<8x64xf32>
    %138 = vector.extract_strided_slice %130 {offsets = [0, 64], sizes = [8, 64], strides = [1, 1]} : vector<8x128xf32> to vector<8x64xf32>
    %cst_56 = arith.constant 5.000000e-01 : f32
    %139 = vector.broadcast %cst_56 : f32 to vector<8x64xf32>
    %140 = arith.mulf %139, %138 : vector<8x64xf32>
    %cst_57 = arith.constant 5.000000e-01 : f32
    %141 = vector.broadcast %cst_57 : f32 to vector<8x64xf32>
    %142 = arith.addf %140, %141 : vector<8x64xf32>
    %143 = vector.extract_strided_slice %132 {offsets = [0, 0], sizes = [8, 64], strides = [1, 1]} : vector<8x128xf32> to vector<8x64xf32>
    %144 = vector.extract_strided_slice %132 {offsets = [0, 64], sizes = [8, 64], strides = [1, 1]} : vector<8x128xf32> to vector<8x64xf32>
    %cst_58 = arith.constant 5.000000e-01 : f32
    %145 = vector.broadcast %cst_58 : f32 to vector<8x64xf32>
    %146 = arith.mulf %145, %144 : vector<8x64xf32>
    %cst_59 = arith.constant 5.000000e-01 : f32
    %147 = vector.broadcast %cst_59 : f32 to vector<8x64xf32>
    %148 = arith.addf %146, %147 : vector<8x64xf32>
    %149 = arith.mulf %142, %122 : vector<8x64xf32>
    %150 = arith.mulf %137, %143 : vector<8x64xf32>
    %151 = arith.addf %149, %150 : vector<8x64xf32>
    %152 = math.tanh %151 : vector<8x64xf32>
    %153 = arith.mulf %148, %152 : vector<8x64xf32>
    %c40 = arith.constant 40 : index
    %c0_60 = arith.constant 0 : index
    %154 = vector.load %arg7[%c40, %c0_60] : memref<64x256xf32, #tpu.memory_space<vmem>>, vector<8x256xf32>
    %c0_61 = arith.constant 0 : index
    %c0_62 = arith.constant 0 : index
    %155 = vector.load %arg2[%c0_61, %c0_62] : memref<64x256xf32, #tpu.memory_space<vmem>>, vector<64x256xf32>
    %cst_63 = arith.constant dense<0.000000e+00> : vector<8x256xf32>
    %156 = tpu.matmul %153, %155, %cst_63 {dimension_numbers = #tpu.dot_dimension_numbers<[1], [0], [0], [1], [0, 0, 1, 1], [], []>} : vector<8x64xf32>, vector<64x256xf32>, vector<8x256xf32> -> vector<8x256xf32>
    %157 = arith.addf %154, %156 : vector<8x256xf32>
    %158 = vector.extract_strided_slice %157 {offsets = [0, 0], sizes = [8, 128], strides = [1, 1]} : vector<8x256xf32> to vector<8x128xf32>
    %159 = math.tanh %158 : vector<8x128xf32>
    %160 = vector.extract_strided_slice %157 {offsets = [0, 128], sizes = [8, 128], strides = [1, 1]} : vector<8x256xf32> to vector<8x128xf32>
    %161 = math.tanh %160 : vector<8x128xf32>
    %162 = vector.extract_strided_slice %159 {offsets = [0, 0], sizes = [8, 64], strides = [1, 1]} : vector<8x128xf32> to vector<8x64xf32>
    %cst_64 = arith.constant 5.000000e-01 : f32
    %163 = vector.broadcast %cst_64 : f32 to vector<8x64xf32>
    %164 = arith.mulf %163, %162 : vector<8x64xf32>
    %cst_65 = arith.constant 5.000000e-01 : f32
    %165 = vector.broadcast %cst_65 : f32 to vector<8x64xf32>
    %166 = arith.addf %164, %165 : vector<8x64xf32>
    %167 = vector.extract_strided_slice %159 {offsets = [0, 64], sizes = [8, 64], strides = [1, 1]} : vector<8x128xf32> to vector<8x64xf32>
    %cst_66 = arith.constant 5.000000e-01 : f32
    %168 = vector.broadcast %cst_66 : f32 to vector<8x64xf32>
    %169 = arith.mulf %168, %167 : vector<8x64xf32>
    %cst_67 = arith.constant 5.000000e-01 : f32
    %170 = vector.broadcast %cst_67 : f32 to vector<8x64xf32>
    %171 = arith.addf %169, %170 : vector<8x64xf32>
    %172 = vector.extract_strided_slice %161 {offsets = [0, 0], sizes = [8, 64], strides = [1, 1]} : vector<8x128xf32> to vector<8x64xf32>
    %173 = vector.extract_strided_slice %161 {offsets = [0, 64], sizes = [8, 64], strides = [1, 1]} : vector<8x128xf32> to vector<8x64xf32>
    %cst_68 = arith.constant 5.000000e-01 : f32
    %174 = vector.broadcast %cst_68 : f32 to vector<8x64xf32>
    %175 = arith.mulf %174, %173 : vector<8x64xf32>
    %cst_69 = arith.constant 5.000000e-01 : f32
    %176 = vector.broadcast %cst_69 : f32 to vector<8x64xf32>
    %177 = arith.addf %175, %176 : vector<8x64xf32>
    %178 = arith.mulf %171, %151 : vector<8x64xf32>
    %179 = arith.mulf %166, %172 : vector<8x64xf32>
    %180 = arith.addf %178, %179 : vector<8x64xf32>
    %181 = math.tanh %180 : vector<8x64xf32>
    %182 = arith.mulf %177, %181 : vector<8x64xf32>
    %c48 = arith.constant 48 : index
    %c0_70 = arith.constant 0 : index
    %183 = vector.load %arg7[%c48, %c0_70] : memref<64x256xf32, #tpu.memory_space<vmem>>, vector<8x256xf32>
    %c0_71 = arith.constant 0 : index
    %c0_72 = arith.constant 0 : index
    %184 = vector.load %arg2[%c0_71, %c0_72] : memref<64x256xf32, #tpu.memory_space<vmem>>, vector<64x256xf32>
    %cst_73 = arith.constant dense<0.000000e+00> : vector<8x256xf32>
    %185 = tpu.matmul %182, %184, %cst_73 {dimension_numbers = #tpu.dot_dimension_numbers<[1], [0], [0], [1], [0, 0, 1, 1], [], []>} : vector<8x64xf32>, vector<64x256xf32>, vector<8x256xf32> -> vector<8x256xf32>
    %186 = arith.addf %183, %185 : vector<8x256xf32>
    %187 = vector.extract_strided_slice %186 {offsets = [0, 0], sizes = [8, 128], strides = [1, 1]} : vector<8x256xf32> to vector<8x128xf32>
    %188 = math.tanh %187 : vector<8x128xf32>
    %189 = vector.extract_strided_slice %186 {offsets = [0, 128], sizes = [8, 128], strides = [1, 1]} : vector<8x256xf32> to vector<8x128xf32>
    %190 = math.tanh %189 : vector<8x128xf32>
    %191 = vector.extract_strided_slice %188 {offsets = [0, 0], sizes = [8, 64], strides = [1, 1]} : vector<8x128xf32> to vector<8x64xf32>
    %cst_74 = arith.constant 5.000000e-01 : f32
    %192 = vector.broadcast %cst_74 : f32 to vector<8x64xf32>
    %193 = arith.mulf %192, %191 : vector<8x64xf32>
    %cst_75 = arith.constant 5.000000e-01 : f32
    %194 = vector.broadcast %cst_75 : f32 to vector<8x64xf32>
    %195 = arith.addf %193, %194 : vector<8x64xf32>
    %196 = vector.extract_strided_slice %188 {offsets = [0, 64], sizes = [8, 64], strides = [1, 1]} : vector<8x128xf32> to vector<8x64xf32>
    %cst_76 = arith.constant 5.000000e-01 : f32
    %197 = vector.broadcast %cst_76 : f32 to vector<8x64xf32>
    %198 = arith.mulf %197, %196 : vector<8x64xf32>
    %cst_77 = arith.constant 5.000000e-01 : f32
    %199 = vector.broadcast %cst_77 : f32 to vector<8x64xf32>
    %200 = arith.addf %198, %199 : vector<8x64xf32>
    %201 = vector.extract_strided_slice %190 {offsets = [0, 0], sizes = [8, 64], strides = [1, 1]} : vector<8x128xf32> to vector<8x64xf32>
    %202 = vector.extract_strided_slice %190 {offsets = [0, 64], sizes = [8, 64], strides = [1, 1]} : vector<8x128xf32> to vector<8x64xf32>
    %cst_78 = arith.constant 5.000000e-01 : f32
    %203 = vector.broadcast %cst_78 : f32 to vector<8x64xf32>
    %204 = arith.mulf %203, %202 : vector<8x64xf32>
    %cst_79 = arith.constant 5.000000e-01 : f32
    %205 = vector.broadcast %cst_79 : f32 to vector<8x64xf32>
    %206 = arith.addf %204, %205 : vector<8x64xf32>
    %207 = arith.mulf %200, %180 : vector<8x64xf32>
    %208 = arith.mulf %195, %201 : vector<8x64xf32>
    %209 = arith.addf %207, %208 : vector<8x64xf32>
    %210 = math.tanh %209 : vector<8x64xf32>
    %211 = arith.mulf %206, %210 : vector<8x64xf32>
    %c56 = arith.constant 56 : index
    %c0_80 = arith.constant 0 : index
    %212 = vector.load %arg7[%c56, %c0_80] : memref<64x256xf32, #tpu.memory_space<vmem>>, vector<8x256xf32>
    %c0_81 = arith.constant 0 : index
    %c0_82 = arith.constant 0 : index
    %213 = vector.load %arg2[%c0_81, %c0_82] : memref<64x256xf32, #tpu.memory_space<vmem>>, vector<64x256xf32>
    %cst_83 = arith.constant dense<0.000000e+00> : vector<8x256xf32>
    %214 = tpu.matmul %211, %213, %cst_83 {dimension_numbers = #tpu.dot_dimension_numbers<[1], [0], [0], [1], [0, 0, 1, 1], [], []>} : vector<8x64xf32>, vector<64x256xf32>, vector<8x256xf32> -> vector<8x256xf32>
    %215 = arith.addf %212, %214 : vector<8x256xf32>
    %216 = vector.extract_strided_slice %215 {offsets = [0, 0], sizes = [8, 128], strides = [1, 1]} : vector<8x256xf32> to vector<8x128xf32>
    %217 = math.tanh %216 : vector<8x128xf32>
    %218 = vector.extract_strided_slice %215 {offsets = [0, 128], sizes = [8, 128], strides = [1, 1]} : vector<8x256xf32> to vector<8x128xf32>
    %219 = math.tanh %218 : vector<8x128xf32>
    %220 = vector.extract_strided_slice %217 {offsets = [0, 0], sizes = [8, 64], strides = [1, 1]} : vector<8x128xf32> to vector<8x64xf32>
    %cst_84 = arith.constant 5.000000e-01 : f32
    %221 = vector.broadcast %cst_84 : f32 to vector<8x64xf32>
    %222 = arith.mulf %221, %220 : vector<8x64xf32>
    %cst_85 = arith.constant 5.000000e-01 : f32
    %223 = vector.broadcast %cst_85 : f32 to vector<8x64xf32>
    %224 = arith.addf %222, %223 : vector<8x64xf32>
    %225 = vector.extract_strided_slice %217 {offsets = [0, 64], sizes = [8, 64], strides = [1, 1]} : vector<8x128xf32> to vector<8x64xf32>
    %cst_86 = arith.constant 5.000000e-01 : f32
    %226 = vector.broadcast %cst_86 : f32 to vector<8x64xf32>
    %227 = arith.mulf %226, %225 : vector<8x64xf32>
    %cst_87 = arith.constant 5.000000e-01 : f32
    %228 = vector.broadcast %cst_87 : f32 to vector<8x64xf32>
    %229 = arith.addf %227, %228 : vector<8x64xf32>
    %230 = vector.extract_strided_slice %219 {offsets = [0, 0], sizes = [8, 64], strides = [1, 1]} : vector<8x128xf32> to vector<8x64xf32>
    %231 = vector.extract_strided_slice %219 {offsets = [0, 64], sizes = [8, 64], strides = [1, 1]} : vector<8x128xf32> to vector<8x64xf32>
    %cst_88 = arith.constant 5.000000e-01 : f32
    %232 = vector.broadcast %cst_88 : f32 to vector<8x64xf32>
    %233 = arith.mulf %232, %231 : vector<8x64xf32>
    %cst_89 = arith.constant 5.000000e-01 : f32
    %234 = vector.broadcast %cst_89 : f32 to vector<8x64xf32>
    %235 = arith.addf %233, %234 : vector<8x64xf32>
    %236 = arith.mulf %229, %209 : vector<8x64xf32>
    %237 = arith.mulf %224, %230 : vector<8x64xf32>
    %238 = arith.addf %236, %237 : vector<8x64xf32>
    %239 = math.tanh %238 : vector<8x64xf32>
    %240 = arith.mulf %235, %239 : vector<8x64xf32>
    %c0_90 = arith.constant 0 : index
    %c0_91 = arith.constant 0 : index
    %241 = vector.load %arg4[%c0_90, %c0_91] : memref<64x128xf32, #tpu.memory_space<vmem>>, vector<64x128xf32>
    %cst_92 = arith.constant dense<0.000000e+00> : vector<8x128xf32>
    %242 = tpu.matmul %240, %241, %cst_92 {dimension_numbers = #tpu.dot_dimension_numbers<[1], [0], [0], [1], [0, 0, 1, 1], [], []>} : vector<8x64xf32>, vector<64x128xf32>, vector<8x128xf32> -> vector<8x128xf32>
    %c0_93 = arith.constant 0 : index
    %c0_94 = arith.constant 0 : index
    %243 = vector.load %arg5[%c0_93, %c0_94] : memref<1x128xf32, #tpu.memory_space<vmem>>, vector<1x128xf32>
    %244 = vector.broadcast %243 : vector<1x128xf32> to vector<8x128xf32>
    %245 = arith.addf %242, %244 : vector<8x128xf32>
    %c0_95 = arith.constant 0 : index
    %c0_96 = arith.constant 0 : index
    %246 = vector.load %arg6[%c0_95, %c0_96] : memref<8x128xf32, #tpu.memory_space<vmem>>, vector<8x128xf32>
    tpu.vector_store %arg6[%c0_95, %c0_96], %245 {strides = array<i32>} : memref<8x128xf32, #tpu.memory_space<vmem>>, vector<8x128xf32>,
    return
  }
}

</mosaic_0001>

<llo_original>
// kernel: rnn_forward.1
$region0: #{rnn_forward.1}
  #allocation0 [shape = 'u32[]', space=smem, size = 0x4, offset = 0x4, fixed_abs, tag = 'smem constant byte address 0x4 - core index']
  #allocation1 [shape = 'u32[144,128]{1,0:T(1,128)}', space=vmem, size = 0x12000, scoped, tag = 'internal scratch']
  #allocation2 [shape = 'f32[64,256]{1,0:T(8,128)}', space=vmem, size = 0x10000, scoped, tag = 'scratch operand']
  %s0 = inlined_call_operand.vmem [shape: f32[64,32], index: 0, kind: input, shape index: {}]
  %s1 = inlined_call_operand.vmem [shape: f32[32,256], index: 1, kind: input, shape index: {}]
  %s2 = inlined_call_operand.hbm [shape: f32[64,256], index: 2, kind: input, shape index: {}]
  %s3 = inlined_call_operand.vmem [shape: f32[1,256], index: 3, kind: input, shape index: {}]
  %s4 = inlined_call_operand.hbm [shape: f32[64,128], index: 4, kind: input, shape index: {}]
  %s5 = inlined_call_operand.vmem [shape: f32[1,128], index: 5, kind: input, shape index: {}]
  %s6 = inlined_call_operand.vmem [shape: f32[8,128], index: 6, kind: output, shape index: {}]
  %s7 = sld [smem:[#allocation0]]
  $region42: #{rnn_forward.1} parent=0
    _
  %s9 = ssub.s32 1, %s7
  %s10 = scalar_select 0, %s9, %s7
  $region1: #{rnn_forward.1} parent=0
    #allocation3 [shape = 'u8[65536]{0}', space=vmem, size = 0x10000, scoped, tag = 'input window, operand 2, single buffered']
    #allocation4 [shape = 's32[1]{0}', space=sflag, size = 0x4, scoped, tag = 'scoped memory for rnn_forward.1']
    #allocation5 [shape = 'u8[32768]{0}', space=vmem, size = 0x8000, scoped, tag = 'input window, operand 4, single buffered']
    #allocation6 [shape = 's32[1]{0}', space=sflag, size = 0x4, scoped, tag = 'scoped memory for rnn_forward.1']
    %11 = vsyncpa [#allocation4], 0
    %12 = vsyncpa [#allocation6], 0
    // Predicated region
    $region2: #{rnn_forward.1} parent=1 // pred_check
      _
    $region3: #{rnn_forward.1} parent=1 // pred_check_branch
      %14 = sbr.rel (0) target = $region5
    $region4: #{rnn_forward.1} parent=1 // pred_region
      _
    $region5: #{rnn_forward.1} parent=1 // pred_fallthru
      _
    // Predicated region
    $region6: #{rnn_forward.1} parent=1 // pred_check
      _
    $region7: #{rnn_forward.1} parent=1 // pred_check_branch
      %16 = sbr.rel (0) target = $region9
    $region8: #{rnn_forward.1} parent=1 // pred_region
      _
    $region9: #{rnn_forward.1} parent=1 // pred_fallthru
      _
    // Predicated region
    $region10: #{rnn_forward.1} parent=1 // pred_check
      _
    $region11: #{rnn_forward.1} parent=1 // pred_check_branch
      %18 = sbr.rel (0) target = $region13
    $region12: #{rnn_forward.1} parent=1 // pred_region
      %s20 = ssub.s32 2048, 2048
      %21 = vsyncadd [#allocation4], %s20
      %s22 = sshll.u32 [#allocation3], 4
      %s23 = int_to_ptr.vmem [resolvable:$true] %s22
      %28 = dma.hbm_to_vmem [thread:$0]  %s2, 2048, %s23, [#allocation4], 256, 256, 16
    $region13: #{rnn_forward.1} parent=1 // pred_fallthru
      _
    // Predicated region
    $region14: #{rnn_forward.1} parent=1 // pred_check
      _
    $region15: #{rnn_forward.1} parent=1 // pred_check_branch
      %30 = sbr.rel (0) target = $region17
    $region16: #{rnn_forward.1} parent=1 // pred_region
      _
    $region17: #{rnn_forward.1} parent=1 // pred_fallthru
      _
    // Predicated region
    $region18: #{rnn_forward.1} parent=1 // pred_check
      _
    $region19: #{rnn_forward.1} parent=1 // pred_check_branch
      %32 = sbr.rel (0) target = $region21
    $region20: #{rnn_forward.1} parent=1 // pred_region
      %s34 = ssub.s32 1024, 1024
      %35 = vsyncadd [#allocation6], %s34
      %s36 = sshll.u32 [#allocation5], 4
      %s37 = int_to_ptr.vmem [resolvable:$true] %s36
      %42 = dma.hbm_to_vmem [thread:$0]  %s4, 1024, %s37, [#allocation6], 128, 128, 8
    $region21: #{rnn_forward.1} parent=1 // pred_fallthru
      _
    // Predicated region
    $region22: #{rnn_forward.1} parent=1 // pred_check
      _
    $region23: #{rnn_forward.1} parent=1 // pred_check_branch
      %44 = sbr.rel (0) target = $region25
    $region24: #{rnn_forward.1} parent=1 // pred_region
      _
    $region25: #{rnn_forward.1} parent=1 // pred_fallthru
      _
    // Predicated region
    $region26: #{rnn_forward.1} parent=1 // pred_check
      _
    $region27: #{rnn_forward.1} parent=1 // pred_check_branch
      %46 = sbr.rel (0) target = $region29
    $region28: #{rnn_forward.1} parent=1 // pred_region
      %47 = dma.done [#allocation4], 2048
    $region29: #{rnn_forward.1} parent=1 // pred_fallthru
      _
    // Predicated region
    $region30: #{rnn_forward.1} parent=1 // pred_check
      _
    $region31: #{rnn_forward.1} parent=1 // pred_check_branch
      %49 = sbr.rel (0) target = $region33
    $region32: #{rnn_forward.1} parent=1 // pred_region
      %50 = dma.done [#allocation6], 1024
    $region33: #{rnn_forward.1} parent=1 // pred_fallthru
      _
    %v51 = vld [vmem:[%s0] sm:$0xff]
    %v52 = vld [vmem:[%s0 + $0x8] sm:$0xff]
    %v53 = vld [vmem:[%s0 + $0x10] sm:$0xff]
    %v54 = vld [vmem:[%s0 + $0x18] sm:$0xff]
    %v55 = vld [vmem:[%s0 + $0x20] sm:$0xff]
    %v56 = vld [vmem:[%s0 + $0x28] sm:$0xff]
    %v57 = vld [vmem:[%s0 + $0x30] sm:$0xff]
    %v58 = vld [vmem:[%s0 + $0x38] sm:$0xff]
    %v59 = vld [vmem:[%s1] sm:$0xff]
    %v60 = vld [vmem:[%s1 + $0x8] sm:$0xff]
    %v61 = vld [vmem:[%s1 + $0x10] sm:$0xff]
    %v62 = vld [vmem:[%s1 + $0x18] sm:$0xff]
    %v63 = vld [vmem:[%s1 + $0x20] sm:$0xff]
    %v64 = vld [vmem:[%s1 + $0x28] sm:$0xff]
    %v65 = vld [vmem:[%s1 + $0x30] sm:$0xff]
    %v66 = vld [vmem:[%s1 + $0x38] sm:$0xff]
    %v67 = vld [vmem:[%s3] sm:$0x3]
    %v69 = vlaneseq
    %v70 = vshrl.u32 %v69, 7
    %v71 = vsub.s32 0, %v70
    %v72 = vrot.slane %v67, %v71
    %v73 = vlaneseq
    %v74 = vshrl.u32 %v73, 7
    %v75 = vsub.s32 1, %v74
    %v76 = vrot.slane %v67, %v75
    %vm79 = vcmask 261120
    %v81 = vsel %vm79, %v51, 0
    %v84 = vsel %vm79, %v52, 0
    %v87 = vsel %vm79, %v53, 0
    %v90 = vsel %vm79, %v54, 0
    %v93 = vsel %vm79, %v55, 0
    %v96 = vsel %vm79, %v56, 0
    %v99 = vsel %vm79, %v57, 0
    %v102 = vsel %vm79, %v58, 0
    %104 = vmatprep.subr.mxu0 0.0
    %105 = vmatpush1.msra.mxu0 0.0
    %106 = vmatprep.subr.mxu0 0.0
    %107 = vmatpush1.msra.mxu0 0.0
    %108 = vmatprep.subr.mxu0 0.0
    %109 = vmatpush1.msra.mxu0 0.0
    %110 = vmatprep.subr.mxu0 0.0
    %111 = vmatpush1.msra.mxu0 0.0
    %112 = vmatprep.subr.mxu0 0.0
    %113 = vmatpush1.msra.mxu0 0.0
    %114 = vmatprep.subr.mxu0 0.0
    %115 = vmatpush1.msra.mxu0 0.0
    %116 = vmatprep.subr.mxu0 0.0
    %117 = vmatpush1.msra.mxu0 0.0
    %118 = vmatprep.subr.mxu0 0.0
    %119 = vmatpush1.msra.mxu0 0.0
    %120 = vmatprep.subr.mxu0 0.0
    %121 = vmatpush1.msra.mxu0 0.0
    %122 = vmatprep.subr.mxu0 0.0
    %123 = vmatpush1.msra.mxu0 0.0
    %124 = vmatprep.subr.mxu0 0.0
    %125 = vmatpush1.msra.mxu0 0.0
    %126 = vmatprep.subr.mxu0 0.0
    %127 = vmatpush1.msra.mxu0 0.0
    %128 = vmatprep.subr.mxu0 %v66
    %129 = vmatpush1.msra.mxu0 %v65
    %130 = vmatprep.subr.mxu0 %v64
    %131 = vmatpush1.msra.mxu0 %v63
    %132 = vmatprep.subr.mxu0 %v62
    %133 = vmatpush1.msra.mxu0 %v61
    %134 = vmatprep.subr.mxu0 %v60
    %135 = vmatpush1.msra.mxu0 %v59
    %136 = vmatprep.subr.mxu0 0.0
    %137 = vmatpush2.msra.mxu0 0.0
    %138 = vmatprep.subr.mxu0 0.0
    %139 = vmatpush2.msra.mxu0 0.0
    %140 = vmatprep.subr.mxu0 0.0
    %141 = vmatpush2.msra.mxu0 0.0
    %142 = vmatprep.subr.mxu0 0.0
    %143 = vmatpush2.msra.mxu0 0.0
    %144 = vmatprep.subr.mxu0 0.0
    %145 = vmatpush2.msra.mxu0 0.0
    %146 = vmatprep.subr.mxu0 0.0
    %147 = vmatpush2.msra.mxu0 0.0
    %148 = vmatprep.subr.mxu0 0.0
    %149 = vmatpush2.msra.mxu0 0.0
    %150 = vmatprep.subr.mxu0 0.0
    %151 = vmatpush2.msra.mxu0 0.0
    %152 = vmatprep.subr.mxu0 0.0
    %153 = vmatpush2.msra.mxu0 0.0
    %154 = vmatprep.subr.mxu0 0.0
    %155 = vmatpush2.msra.mxu0 0.0
    %156 = vmatprep.subr.mxu0 0.0
    %157 = vmatpush2.msra.mxu0 0.0
    %158 = vmatprep.subr.mxu0 0.0
    %159 = vmatpush2.msra.mxu0 0.0
    %160 = vmatprep.subr.mxu0 0.0
    %161 = vmatpush2.msra.mxu0 0.0
    %162 = vmatprep.subr.mxu0 0.0
    %163 = vmatpush2.msra.mxu0 0.0
    %164 = vmatprep.subr.mxu0 0.0
    %165 = vmatpush2.msra.mxu0 0.0
    %166 = vmatprep.subr.mxu0 0.0
    %167 = vmatpush2.msra.mxu0 0.0
    %168 = vmatprep.mubr.f32.mxu0 0.0
    %169 = vmatmul.mubr.f32.gmra.mxu0 %v81
    %v170 = vpop.f32.mrf.mxu0
    %v171 = vadd.f32 %v72, %v170
    %v172 = vpop.f32.mrf.mxu0
    %v173 = vadd.f32 %v76, %v172
    %174 = vmatprep.mubr.f32.mxu0 0.0
    %175 = vmatmul.mubr.f32.gmra.mxu0 %v84
    %v176 = vpop.f32.mrf.mxu0
    %v177 = vadd.f32 %v72, %v176
    %v178 = vpop.f32.mrf.mxu0
    %v179 = vadd.f32 %v76, %v178
    %180 = vmatprep.mubr.f32.mxu0 0.0
    %181 = vmatmul.mubr.f32.gmra.mxu0 %v87
    %v182 = vpop.f32.mrf.mxu0
    %v183 = vadd.f32 %v72, %v182
    %v184 = vpop.f32.mrf.mxu0
    %v185 = vadd.f32 %v76, %v184
    %186 = vmatprep.mubr.f32.mxu0 0.0
    %187 = vmatmul.mubr.f32.gmra.mxu0 %v90
    %v188 = vpop.f32.mrf.mxu0
    %v189 = vadd.f32 %v72, %v188
    %v190 = vpop.f32.mrf.mxu0
    %v191 = vadd.f32 %v76, %v190
    %192 = vmatprep.mubr.f32.mxu0 0.0
    %193 = vmatmul.mubr.f32.gmra.mxu0 %v93
    %v194 = vpop.f32.mrf.mxu0
    %v195 = vadd.f32 %v72, %v194
    %v196 = vpop.f32.mrf.mxu0
    %v197 = vadd.f32 %v76, %v196
    %198 = vmatprep.mubr.f32.mxu0 0.0
    %199 = vmatmul.mubr.f32.gmra.mxu0 %v96
    %v200 = vpop.f32.mrf.mxu0
    %v201 = vadd.f32 %v72, %v200
    %v202 = vpop.f32.mrf.mxu0
    %v203 = vadd.f32 %v76, %v202
    %204 = vmatprep.mubr.f32.mxu0 0.0
    %205 = vmatmul.mubr.f32.gmra.mxu0 %v99
    %v206 = vpop.f32.mrf.mxu0
    %v207 = vadd.f32 %v72, %v206
    %v208 = vpop.f32.mrf.mxu0
    %v209 = vadd.f32 %v76, %v208
    %210 = vmatprep.mubr.f32.mxu0 0.0
    %211 = vmatmul.mubr.f32.gmra.mxu0 %v102
    %v212 = vpop.f32.mrf.mxu0
    %v213 = vadd.f32 %v72, %v212
    %v214 = vpop.f32.mrf.mxu0
    %v215 = vadd.f32 %v76, %v214
    %216 = vdwg.mxu0
    %217 = vst [vmem:[#allocation2] sm:$0xff] %v171
    %218 = vst [vmem:[#allocation2 + $0x8] sm:$0xff] %v173
    %219 = vst [vmem:[#allocation2 + $0x10] sm:$0xff] %v177
    %220 = vst [vmem:[#allocation2 + $0x18] sm:$0xff] %v179
    %221 = vst [vmem:[#allocation2 + $0x20] sm:$0xff] %v183
    %222 = vst [vmem:[#allocation2 + $0x28] sm:$0xff] %v185
    %223 = vst [vmem:[#allocation2 + $0x30] sm:$0xff] %v189
    %224 = vst [vmem:[#allocation2 + $0x38] sm:$0xff] %v191
    %225 = vst [vmem:[#allocation2 + $0x40] sm:$0xff] %v195
    %226 = vst [vmem:[#allocation2 + $0x48] sm:$0xff] %v197
    %227 = vst [vmem:[#allocation2 + $0x50] sm:$0xff] %v201
    %228 = vst [vmem:[#allocation2 + $0x58] sm:$0xff] %v203
    %229 = vst [vmem:[#allocation2 + $0x60] sm:$0xff] %v207
    %230 = vst [vmem:[#allocation2 + $0x68] sm:$0xff] %v209
    %231 = vst [vmem:[#allocation2 + $0x70] sm:$0xff] %v213
    %232 = vst [vmem:[#allocation2 + $0x78] sm:$0xff] %v215
    %v233 = vld [vmem:[#allocation2] sm:$0xff]
    %v234 = vld [vmem:[#allocation2 + $0x8] sm:$0xff]
    %v235 = vld [vmem:[#allocation3] sm:$0xff]
    %v236 = vld [vmem:[#allocation3 + $0x8] sm:$0xff]
    %v237 = vld [vmem:[#allocation3 + $0x10] sm:$0xff]
    %v238 = vld [vmem:[#allocation3 + $0x18] sm:$0xff]
    %v239 = vld [vmem:[#allocation3 + $0x20] sm:$0xff]
    %v240 = vld [vmem:[#allocation3 + $0x28] sm:$0xff]
    %v241 = vld [vmem:[#allocation3 + $0x30] sm:$0xff]
    %v242 = vld [vmem:[#allocation3 + $0x38] sm:$0xff]
    %v243 = vld [vmem:[#allocation3 + $0x40] sm:$0xff]
    %v244 = vld [vmem:[#allocation3 + $0x48] sm:$0xff]
    %v245 = vld [vmem:[#allocation3 + $0x50] sm:$0xff]
    %v246 = vld [vmem:[#allocation3 + $0x58] sm:$0xff]
    %v247 = vld [vmem:[#allocation3 + $0x60] sm:$0xff]
    %v248 = vld [vmem:[#allocation3 + $0x68] sm:$0xff]
    %v249 = vld [vmem:[#allocation3 + $0x70] sm:$0xff]
    %v250 = vld [vmem:[#allocation3 + $0x78] sm:$0xff]
    %vm251 = vcmask 523264
    %v253 = vsel %vm251, 0.0, 0
    %255 = vmatprep.subr.mxu0 0.0
    %256 = vmatpush1.msra.mxu0 0.0
    %257 = vmatprep.subr.mxu0 0.0
    %258 = vmatpush1.msra.mxu0 0.0
    %259 = vmatprep.subr.mxu0 0.0
    %260 = vmatpush1.msra.mxu0 0.0
    %261 = vmatprep.subr.mxu0 0.0
    %262 = vmatpush1.msra.mxu0 0.0
    %263 = vmatprep.subr.mxu0 0.0
    %264 = vmatpush1.msra.mxu0 0.0
    %265 = vmatprep.subr.mxu0 0.0
    %266 = vmatpush1.msra.mxu0 0.0
    %267 = vmatprep.subr.mxu0 0.0
    %268 = vmatpush1.msra.mxu0 0.0
    %269 = vmatprep.subr.mxu0 0.0
    %270 = vmatpush1.msra.mxu0 0.0
    %271 = vmatprep.subr.mxu0 %v250
    %272 = vmatpush1.msra.mxu0 %v249
    %273 = vmatprep.subr.mxu0 %v248
    %274 = vmatpush1.msra.mxu0 %v247
    %275 = vmatprep.subr.mxu0 %v246
    %276 = vmatpush1.msra.mxu0 %v245
    %277 = vmatprep.subr.mxu0 %v244
    %278 = vmatpush1.msra.mxu0 %v243
    %279 = vmatprep.subr.mxu0 %v242
    %280 = vmatpush1.msra.mxu0 %v241
    %281 = vmatprep.subr.mxu0 %v240
    %282 = vmatpush1.msra.mxu0 %v239
    %283 = vmatprep.subr.mxu0 %v238
    %284 = vmatpush1.msra.mxu0 %v237
    %285 = vmatprep.subr.mxu0 %v236
    %286 = vmatpush1.msra.mxu0 %v235
    %287 = vmatprep.subr.mxu0 0.0
    %288 = vmatpush2.msra.mxu0 0.0
    %289 = vmatprep.subr.mxu0 0.0
    %290 = vmatpush2.msra.mxu0 0.0
    %291 = vmatprep.subr.mxu0 0.0
    %292 = vmatpush2.msra.mxu0 0.0
    %293 = vmatprep.subr.mxu0 0.0
    %294 = vmatpush2.msra.mxu0 0.0
    %295 = vmatprep.subr.mxu0 0.0
    %296 = vmatpush2.msra.mxu0 0.0
    %297 = vmatprep.subr.mxu0 0.0
    %298 = vmatpush2.msra.mxu0 0.0
    %299 = vmatprep.subr.mxu0 0.0
    %300 = vmatpush2.msra.mxu0 0.0
    %301 = vmatprep.subr.mxu0 0.0
    %302 = vmatpush2.msra.mxu0 0.0
    %303 = vmatprep.subr.mxu0 0.0
    %304 = vmatpush2.msra.mxu0 0.0
    %305 = vmatprep.subr.mxu0 0.0
    %306 = vmatpush2.msra.mxu0 0.0
    %307 = vmatprep.subr.mxu0 0.0
    %308 = vmatpush2.msra.mxu0 0.0
    %309 = vmatprep.subr.mxu0 0.0
    %310 = vmatpush2.msra.mxu0 0.0
    %311 = vmatprep.subr.mxu0 0.0
    %312 = vmatpush2.msra.mxu0 0.0
    %313 = vmatprep.subr.mxu0 0.0
    %314 = vmatpush2.msra.mxu0 0.0
    %315 = vmatprep.subr.mxu0 0.0
    %316 = vmatpush2.msra.mxu0 0.0
    %317 = vmatprep.subr.mxu0 0.0
    %318 = vmatpush2.msra.mxu0 0.0
    %319 = vmatprep.mubr.f32.mxu0 0.0
    %320 = vmatmul.mubr.f32.gmra.mxu0 %v253
    %v321 = vpop.f32.mrf.mxu0
    %v322 = vadd.f32 0.0, %v321
    %v323 = vpop.f32.mrf.mxu0
    %v324 = vadd.f32 0.0, %v323
    %325 = vdwg.mxu0
    %v326 = vadd.f32 %v233, %v322
    %v327 = vadd.f32 %v234, %v324
    %v328 = vtanh.pop %v326
    %v329 = vtanh.pop %v327
    %v330 = vmul.f32 %v328, 0.5
    %v331 = vadd.f32 %v330, 0.5
    %v332 = vmul.f32 %v329, 0.5
    %v333 = vadd.f32 %v332, 0.5
    %v334 = vmul.f32 %v331, 0.0
    %v335 = vmul.f32 %v331, %v329
    %337 = vrot.lane.b32.xlu0 %v335, 64
    %v338 = vpop.permute.xlu0 %337
    %v340 = vadd.f32 %v334, %v338
    %v341 = vtanh.pop %v340
    %v342 = vmul.f32 %v333, %v341
    %v343 = vld [vmem:[#allocation2 + $0x10] sm:$0xff]
    %v344 = vld [vmem:[#allocation2 + $0x18] sm:$0xff]
    %346 = vrot.lane.b32.xlu0 %v342, 64
    %v347 = vpop.permute.xlu0 %346
    %v348 = vsel %vm251, %v347, 0
    %350 = vmatprep.subr.mxu0 0.0
    %351 = vmatpush1.msra.mxu0 0.0
    %352 = vmatprep.subr.mxu0 0.0
    %353 = vmatpush1.msra.mxu0 0.0
    %354 = vmatprep.subr.mxu0 0.0
    %355 = vmatpush1.msra.mxu0 0.0
    %356 = vmatprep.subr.mxu0 0.0
    %357 = vmatpush1.msra.mxu0 0.0
    %358 = vmatprep.subr.mxu0 0.0
    %359 = vmatpush1.msra.mxu0 0.0
    %360 = vmatprep.subr.mxu0 0.0
    %361 = vmatpush1.msra.mxu0 0.0
    %362 = vmatprep.subr.mxu0 0.0
    %363 = vmatpush1.msra.mxu0 0.0
    %364 = vmatprep.subr.mxu0 0.0
    %365 = vmatpush1.msra.mxu0 0.0
    %366 = vmatprep.subr.mxu0 %v250
    %367 = vmatpush1.msra.mxu0 %v249
    %368 = vmatprep.subr.mxu0 %v248
    %369 = vmatpush1.msra.mxu0 %v247
    %370 = vmatprep.subr.mxu0 %v246
    %371 = vmatpush1.msra.mxu0 %v245
    %372 = vmatprep.subr.mxu0 %v244
    %373 = vmatpush1.msra.mxu0 %v243
    %374 = vmatprep.subr.mxu0 %v242
    %375 = vmatpush1.msra.mxu0 %v241
    %376 = vmatprep.subr.mxu0 %v240
    %377 = vmatpush1.msra.mxu0 %v239
    %378 = vmatprep.subr.mxu0 %v238
    %379 = vmatpush1.msra.mxu0 %v237
    %380 = vmatprep.subr.mxu0 %v236
    %381 = vmatpush1.msra.mxu0 %v235
    %382 = vmatprep.subr.mxu0 0.0
    %383 = vmatpush2.msra.mxu0 0.0
    %384 = vmatprep.subr.mxu0 0.0
    %385 = vmatpush2.msra.mxu0 0.0
    %386 = vmatprep.subr.mxu0 0.0
    %387 = vmatpush2.msra.mxu0 0.0
    %388 = vmatprep.subr.mxu0 0.0
    %389 = vmatpush2.msra.mxu0 0.0
    %390 = vmatprep.subr.mxu0 0.0
    %391 = vmatpush2.msra.mxu0 0.0
    %392 = vmatprep.subr.mxu0 0.0
    %393 = vmatpush2.msra.mxu0 0.0
    %394 = vmatprep.subr.mxu0 0.0
    %395 = vmatpush2.msra.mxu0 0.0
    %396 = vmatprep.subr.mxu0 0.0
    %397 = vmatpush2.msra.mxu0 0.0
    %398 = vmatprep.subr.mxu0 0.0
    %399 = vmatpush2.msra.mxu0 0.0
    %400 = vmatprep.subr.mxu0 0.0
    %401 = vmatpush2.msra.mxu0 0.0
    %402 = vmatprep.subr.mxu0 0.0
    %403 = vmatpush2.msra.mxu0 0.0
    %404 = vmatprep.subr.mxu0 0.0
    %405 = vmatpush2.msra.mxu0 0.0
    %406 = vmatprep.subr.mxu0 0.0
    %407 = vmatpush2.msra.mxu0 0.0
    %408 = vmatprep.subr.mxu0 0.0
    %409 = vmatpush2.msra.mxu0 0.0
    %410 = vmatprep.subr.mxu0 0.0
    %411 = vmatpush2.msra.mxu0 0.0
    %412 = vmatprep.subr.mxu0 0.0
    %413 = vmatpush2.msra.mxu0 0.0
    %414 = vmatprep.mubr.f32.mxu0 0.0
    %415 = vmatmul.mubr.f32.gmra.mxu0 %v348
    %v416 = vpop.f32.mrf.mxu0
    %v417 = vadd.f32 0.0, %v416
    %v418 = vpop.f32.mrf.mxu0
    %v419 = vadd.f32 0.0, %v418
    %420 = vdwg.mxu0
    %v421 = vadd.f32 %v343, %v417
    %v422 = vadd.f32 %v344, %v419
    %v423 = vtanh.pop %v421
    %v424 = vtanh.pop %v422
    %v425 = vmul.f32 %v423, 0.5
    %v426 = vadd.f32 %v425, 0.5
    %v427 = vmul.f32 %v424, 0.5
    %v428 = vadd.f32 %v427, 0.5
    %v429 = vmul.f32 %v426, %v340
    %v430 = vmul.f32 %v426, %v424
    %432 = vrot.lane.b32.xlu0 %v430, 64
    %v433 = vpop.permute.xlu0 %432
    %v435 = vadd.f32 %v429, %v433
    %v436 = vtanh.pop %v435
    %v437 = vmul.f32 %v428, %v436
    %v438 = vld [vmem:[#allocation2 + $0x20] sm:$0xff]
    %v439 = vld [vmem:[#allocation2 + $0x28] sm:$0xff]
    %441 = vrot.lane.b32.xlu0 %v437, 64
    %v442 = vpop.permute.xlu0 %441
    %v443 = vsel %vm251, %v442, 0
    %445 = vmatprep.subr.mxu0 0.0
    %446 = vmatpush1.msra.mxu0 0.0
    %447 = vmatprep.subr.mxu0 0.0
    %448 = vmatpush1.msra.mxu0 0.0
    %449 = vmatprep.subr.mxu0 0.0
    %450 = vmatpush1.msra.mxu0 0.0
    %451 = vmatprep.subr.mxu0 0.0
    %452 = vmatpush1.msra.mxu0 0.0
    %453 = vmatprep.subr.mxu0 0.0
    %454 = vmatpush1.msra.mxu0 0.0
    %455 = vmatprep.subr.mxu0 0.0
    %456 = vmatpush1.msra.mxu0 0.0
    %457 = vmatprep.subr.mxu0 0.0
    %458 = vmatpush1.msra.mxu0 0.0
    %459 = vmatprep.subr.mxu0 0.0
    %460 = vmatpush1.msra.mxu0 0.0
    %461 = vmatprep.subr.mxu0 %v250
    %462 = vmatpush1.msra.mxu0 %v249
    %463 = vmatprep.subr.mxu0 %v248
    %464 = vmatpush1.msra.mxu0 %v247
    %465 = vmatprep.subr.mxu0 %v246
    %466 = vmatpush1.msra.mxu0 %v245
    %467 = vmatprep.subr.mxu0 %v244
    %468 = vmatpush1.msra.mxu0 %v243
    %469 = vmatprep.subr.mxu0 %v242
    %470 = vmatpush1.msra.mxu0 %v241
    %471 = vmatprep.subr.mxu0 %v240
    %472 = vmatpush1.msra.mxu0 %v239
    %473 = vmatprep.subr.mxu0 %v238
    %474 = vmatpush1.msra.mxu0 %v237
    %475 = vmatprep.subr.mxu0 %v236
    %476 = vmatpush1.msra.mxu0 %v235
    %477 = vmatprep.subr.mxu0 0.0
    %478 = vmatpush2.msra.mxu0 0.0
    %479 = vmatprep.subr.mxu0 0.0
    %480 = vmatpush2.msra.mxu0 0.0
    %481 = vmatprep.subr.mxu0 0.0
    %482 = vmatpush2.msra.mxu0 0.0
    %483 = vmatprep.subr.mxu0 0.0
    %484 = vmatpush2.msra.mxu0 0.0
    %485 = vmatprep.subr.mxu0 0.0
    %486 = vmatpush2.msra.mxu0 0.0
    %487 = vmatprep.subr.mxu0 0.0
    %488 = vmatpush2.msra.mxu0 0.0
    %489 = vmatprep.subr.mxu0 0.0
    %490 = vmatpush2.msra.mxu0 0.0
    %491 = vmatprep.subr.mxu0 0.0
    %492 = vmatpush2.msra.mxu0 0.0
    %493 = vmatprep.subr.mxu0 0.0
    %494 = vmatpush2.msra.mxu0 0.0
    %495 = vmatprep.subr.mxu0 0.0
    %496 = vmatpush2.msra.mxu0 0.0
    %497 = vmatprep.subr.mxu0 0.0
    %498 = vmatpush2.msra.mxu0 0.0
    %499 = vmatprep.subr.mxu0 0.0
    %500 = vmatpush2.msra.mxu0 0.0
    %501 = vmatprep.subr.mxu0 0.0
    %502 = vmatpush2.msra.mxu0 0.0
    %503 = vmatprep.subr.mxu0 0.0
    %504 = vmatpush2.msra.mxu0 0.0
    %505 = vmatprep.subr.mxu0 0.0
    %506 = vmatpush2.msra.mxu0 0.0
    %507 = vmatprep.subr.mxu0 0.0
    %508 = vmatpush2.msra.mxu0 0.0
    %509 = vmatprep.mubr.f32.mxu0 0.0
    %510 = vmatmul.mubr.f32.gmra.mxu0 %v443
    %v511 = vpop.f32.mrf.mxu0
    %v512 = vadd.f32 0.0, %v511
    %v513 = vpop.f32.mrf.mxu0
    %v514 = vadd.f32 0.0, %v513
    %515 = vdwg.mxu0
    %v516 = vadd.f32 %v438, %v512
    %v517 = vadd.f32 %v439, %v514
    %v518 = vtanh.pop %v516
    %v519 = vtanh.pop %v517
    %v520 = vmul.f32 %v518, 0.5
    %v521 = vadd.f32 %v520, 0.5
    %v522 = vmul.f32 %v519, 0.5
    %v523 = vadd.f32 %v522, 0.5
    %v524 = vmul.f32 %v521, %v435
    %v525 = vmul.f32 %v521, %v519
    %527 = vrot.lane.b32.xlu0 %v525, 64
    %v528 = vpop.permute.xlu0 %527
    %v530 = vadd.f32 %v524, %v528
    %v531 = vtanh.pop %v530
    %v532 = vmul.f32 %v523, %v531
    %v533 = vld [vmem:[#allocation2 + $0x30] sm:$0xff]
    %v534 = vld [vmem:[#allocation2 + $0x38] sm:$0xff]
    %536 = vrot.lane.b32.xlu0 %v532, 64
    %v537 = vpop.permute.xlu0 %536
    %v538 = vsel %vm251, %v537, 0
    %540 = vmatprep.subr.mxu0 0.0
    %541 = vmatpush1.msra.mxu0 0.0
    %542 = vmatprep.subr.mxu0 0.0
    %543 = vmatpush1.msra.mxu0 0.0
    %544 = vmatprep.subr.mxu0 0.0
    %545 = vmatpush1.msra.mxu0 0.0
    %546 = vmatprep.subr.mxu0 0.0
    %547 = vmatpush1.msra.mxu0 0.0
    %548 = vmatprep.subr.mxu0 0.0
    %549 = vmatpush1.msra.mxu0 0.0
    %550 = vmatprep.subr.mxu0 0.0
    %551 = vmatpush1.msra.mxu0 0.0
    %552 = vmatprep.subr.mxu0 0.0
    %553 = vmatpush1.msra.mxu0 0.0
    %554 = vmatprep.subr.mxu0 0.0
    %555 = vmatpush1.msra.mxu0 0.0
    %556 = vmatprep.subr.mxu0 %v250
    %557 = vmatpush1.msra.mxu0 %v249
    %558 = vmatprep.subr.mxu0 %v248
    %559 = vmatpush1.msra.mxu0 %v247
    %560 = vmatprep.subr.mxu0 %v246
    %561 = vmatpush1.msra.mxu0 %v245
    %562 = vmatprep.subr.mxu0 %v244
    %563 = vmatpush1.msra.mxu0 %v243
    %564 = vmatprep.subr.mxu0 %v242
    %565 = vmatpush1.msra.mxu0 %v241
    %566 = vmatprep.subr.mxu0 %v240
    %567 = vmatpush1.msra.mxu0 %v239
    %568 = vmatprep.subr.mxu0 %v238
    %569 = vmatpush1.msra.mxu0 %v237
    %570 = vmatprep.subr.mxu0 %v236
    %571 = vmatpush1.msra.mxu0 %v235
    %572 = vmatprep.subr.mxu0 0.0
    %573 = vmatpush2.msra.mxu0 0.0
    %574 = vmatprep.subr.mxu0 0.0
    %575 = vmatpush2.msra.mxu0 0.0
    %576 = vmatprep.subr.mxu0 0.0
    %577 = vmatpush2.msra.mxu0 0.0
    %578 = vmatprep.subr.mxu0 0.0
    %579 = vmatpush2.msra.mxu0 0.0
    %580 = vmatprep.subr.mxu0 0.0
    %581 = vmatpush2.msra.mxu0 0.0
    %582 = vmatprep.subr.mxu0 0.0
    %583 = vmatpush2.msra.mxu0 0.0
    %584 = vmatprep.subr.mxu0 0.0
    %585 = vmatpush2.msra.mxu0 0.0
    %586 = vmatprep.subr.mxu0 0.0
    %587 = vmatpush2.msra.mxu0 0.0
    %588 = vmatprep.subr.mxu0 0.0
    %589 = vmatpush2.msra.mxu0 0.0
    %590 = vmatprep.subr.mxu0 0.0
    %591 = vmatpush2.msra.mxu0 0.0
    %592 = vmatprep.subr.mxu0 0.0
    %593 = vmatpush2.msra.mxu0 0.0
    %594 = vmatprep.subr.mxu0 0.0
    %595 = vmatpush2.msra.mxu0 0.0
    %596 = vmatprep.subr.mxu0 0.0
    %597 = vmatpush2.msra.mxu0 0.0
    %598 = vmatprep.subr.mxu0 0.0
    %599 = vmatpush2.msra.mxu0 0.0
    %600 = vmatprep.subr.mxu0 0.0
    %601 = vmatpush2.msra.mxu0 0.0
    %602 = vmatprep.subr.mxu0 0.0
    %603 = vmatpush2.msra.mxu0 0.0
    %604 = vmatprep.mubr.f32.mxu0 0.0
    %605 = vmatmul.mubr.f32.gmra.mxu0 %v538
    %v606 = vpop.f32.mrf.mxu0
    %v607 = vadd.f32 0.0, %v606
    %v608 = vpop.f32.mrf.mxu0
    %v609 = vadd.f32 0.0, %v608
    %610 = vdwg.mxu0
    %v611 = vadd.f32 %v533, %v607
    %v612 = vadd.f32 %v534, %v609
    %v613 = vtanh.pop %v611
    %v614 = vtanh.pop %v612
    %v615 = vmul.f32 %v613, 0.5
    %v616 = vadd.f32 %v615, 0.5
    %v617 = vmul.f32 %v614, 0.5
    %v618 = vadd.f32 %v617, 0.5
    %v619 = vmul.f32 %v616, %v530
    %v620 = vmul.f32 %v616, %v614
    %622 = vrot.lane.b32.xlu0 %v620, 64
    %v623 = vpop.permute.xlu0 %622
    %v625 = vadd.f32 %v619, %v623
    %v626 = vtanh.pop %v625
    %v627 = vmul.f32 %v618, %v626
    %v628 = vld [vmem:[#allocation2 + $0x40] sm:$0xff]
    %v629 = vld [vmem:[#allocation2 + $0x48] sm:$0xff]
    %631 = vrot.lane.b32.xlu0 %v627, 64
    %v632 = vpop.permute.xlu0 %631
    %v633 = vsel %vm251, %v632, 0
    %635 = vmatprep.subr.mxu0 0.0
    %636 = vmatpush1.msra.mxu0 0.0
    %637 = vmatprep.subr.mxu0 0.0
    %638 = vmatpush1.msra.mxu0 0.0
    %639 = vmatprep.subr.mxu0 0.0
    %640 = vmatpush1.msra.mxu0 0.0
    %641 = vmatprep.subr.mxu0 0.0
    %642 = vmatpush1.msra.mxu0 0.0
    %643 = vmatprep.subr.mxu0 0.0
    %644 = vmatpush1.msra.mxu0 0.0
    %645 = vmatprep.subr.mxu0 0.0
    %646 = vmatpush1.msra.mxu0 0.0
    %647 = vmatprep.subr.mxu0 0.0
    %648 = vmatpush1.msra.mxu0 0.0
    %649 = vmatprep.subr.mxu0 0.0
    %650 = vmatpush1.msra.mxu0 0.0
    %651 = vmatprep.subr.mxu0 %v250
    %652 = vmatpush1.msra.mxu0 %v249
    %653 = vmatprep.subr.mxu0 %v248
    %654 = vmatpush1.msra.mxu0 %v247
    %655 = vmatprep.subr.mxu0 %v246
    %656 = vmatpush1.msra.mxu0 %v245
    %657 = vmatprep.subr.mxu0 %v244
    %658 = vmatpush1.msra.mxu0 %v243
    %659 = vmatprep.subr.mxu0 %v242
    %660 = vmatpush1.msra.mxu0 %v241
    %661 = vmatprep.subr.mxu0 %v240
    %662 = vmatpush1.msra.mxu0 %v239
    %663 = vmatprep.subr.mxu0 %v238
    %664 = vmatpush1.msra.mxu0 %v237
    %665 = vmatprep.subr.mxu0 %v236
    %666 = vmatpush1.msra.mxu0 %v235
    %667 = vmatprep.subr.mxu0 0.0
    %668 = vmatpush2.msra.mxu0 0.0
    %669 = vmatprep.subr.mxu0 0.0
    %670 = vmatpush2.msra.mxu0 0.0
    %671 = vmatprep.subr.mxu0 0.0
    %672 = vmatpush2.msra.mxu0 0.0
    %673 = vmatprep.subr.mxu0 0.0
    %674 = vmatpush2.msra.mxu0 0.0
    %675 = vmatprep.subr.mxu0 0.0
    %676 = vmatpush2.msra.mxu0 0.0
    %677 = vmatprep.subr.mxu0 0.0
    %678 = vmatpush2.msra.mxu0 0.0
    %679 = vmatprep.subr.mxu0 0.0
    %680 = vmatpush2.msra.mxu0 0.0
    %681 = vmatprep.subr.mxu0 0.0
    %682 = vmatpush2.msra.mxu0 0.0
    %683 = vmatprep.subr.mxu0 0.0
    %684 = vmatpush2.msra.mxu0 0.0
    %685 = vmatprep.subr.mxu0 0.0
    %686 = vmatpush2.msra.mxu0 0.0
    %687 = vmatprep.subr.mxu0 0.0
    %688 = vmatpush2.msra.mxu0 0.0
    %689 = vmatprep.subr.mxu0 0.0
    %690 = vmatpush2.msra.mxu0 0.0
    %691 = vmatprep.subr.mxu0 0.0
    %692 = vmatpush2.msra.mxu0 0.0
    %693 = vmatprep.subr.mxu0 0.0
    %694 = vmatpush2.msra.mxu0 0.0
    %695 = vmatprep.subr.mxu0 0.0
    %696 = vmatpush2.msra.mxu0 0.0
    %697 = vmatprep.subr.mxu0 0.0
    %698 = vmatpush2.msra.mxu0 0.0
    %699 = vmatprep.mubr.f32.mxu0 0.0
    %700 = vmatmul.mubr.f32.gmra.mxu0 %v633
    %v701 = vpop.f32.mrf.mxu0
    %v702 = vadd.f32 0.0, %v701
    %v703 = vpop.f32.mrf.mxu0
    %v704 = vadd.f32 0.0, %v703
    %705 = vdwg.mxu0
    %v706 = vadd.f32 %v628, %v702
    %v707 = vadd.f32 %v629, %v704
    %v708 = vtanh.pop %v706
    %v709 = vtanh.pop %v707
    %v710 = vmul.f32 %v708, 0.5
    %v711 = vadd.f32 %v710, 0.5
    %v712 = vmul.f32 %v709, 0.5
    %v713 = vadd.f32 %v712, 0.5
    %v714 = vmul.f32 %v711, %v625
    %v715 = vmul.f32 %v711, %v709
    %717 = vrot.lane.b32.xlu0 %v715, 64
    %v718 = vpop.permute.xlu0 %717
    %v720 = vadd.f32 %v714, %v718
    %v721 = vtanh.pop %v720
    %v722 = vmul.f32 %v713, %v721
    %v723 = vld [vmem:[#allocation2 + $0x50] sm:$0xff]
    %v724 = vld [vmem:[#allocation2 + $0x58] sm:$0xff]
    %726 = vrot.lane.b32.xlu0 %v722, 64
    %v727 = vpop.permute.xlu0 %726
    %v728 = vsel %vm251, %v727, 0
    %730 = vmatprep.subr.mxu0 0.0
    %731 = vmatpush1.msra.mxu0 0.0
    %732 = vmatprep.subr.mxu0 0.0
    %733 = vmatpush1.msra.mxu0 0.0
    %734 = vmatprep.subr.mxu0 0.0
    %735 = vmatpush1.msra.mxu0 0.0
    %736 = vmatprep.subr.mxu0 0.0
    %737 = vmatpush1.msra.mxu0 0.0
    %738 = vmatprep.subr.mxu0 0.0
    %739 = vmatpush1.msra.mxu0 0.0
    %740 = vmatprep.subr.mxu0 0.0
    %741 = vmatpush1.msra.mxu0 0.0
    %742 = vmatprep.subr.mxu0 0.0
    %743 = vmatpush1.msra.mxu0 0.0
    %744 = vmatprep.subr.mxu0 0.0
    %745 = vmatpush1.msra.mxu0 0.0
    %746 = vmatprep.subr.mxu0 %v250
    %747 = vmatpush1.msra.mxu0 %v249
    %748 = vmatprep.subr.mxu0 %v248
    %749 = vmatpush1.msra.mxu0 %v247
    %750 = vmatprep.subr.mxu0 %v246
    %751 = vmatpush1.msra.mxu0 %v245
    %752 = vmatprep.subr.mxu0 %v244
    %753 = vmatpush1.msra.mxu0 %v243
    %754 = vmatprep.subr.mxu0 %v242
    %755 = vmatpush1.msra.mxu0 %v241
    %756 = vmatprep.subr.mxu0 %v240
    %757 = vmatpush1.msra.mxu0 %v239
    %758 = vmatprep.subr.mxu0 %v238
    %759 = vmatpush1.msra.mxu0 %v237
    %760 = vmatprep.subr.mxu0 %v236
    %761 = vmatpush1.msra.mxu0 %v235
    %762 = vmatprep.subr.mxu0 0.0
    %763 = vmatpush2.msra.mxu0 0.0
    %764 = vmatprep.subr.mxu0 0.0
    %765 = vmatpush2.msra.mxu0 0.0
    %766 = vmatprep.subr.mxu0 0.0
    %767 = vmatpush2.msra.mxu0 0.0
    %768 = vmatprep.subr.mxu0 0.0
    %769 = vmatpush2.msra.mxu0 0.0
    %770 = vmatprep.subr.mxu0 0.0
    %771 = vmatpush2.msra.mxu0 0.0
    %772 = vmatprep.subr.mxu0 0.0
    %773 = vmatpush2.msra.mxu0 0.0
    %774 = vmatprep.subr.mxu0 0.0
    %775 = vmatpush2.msra.mxu0 0.0
    %776 = vmatprep.subr.mxu0 0.0
    %777 = vmatpush2.msra.mxu0 0.0
    %778 = vmatprep.subr.mxu0 0.0
    %779 = vmatpush2.msra.mxu0 0.0
    %780 = vmatprep.subr.mxu0 0.0
    %781 = vmatpush2.msra.mxu0 0.0
    %782 = vmatprep.subr.mxu0 0.0
    %783 = vmatpush2.msra.mxu0 0.0
    %784 = vmatprep.subr.mxu0 0.0
    %785 = vmatpush2.msra.mxu0 0.0
    %786 = vmatprep.subr.mxu0 0.0
    %787 = vmatpush2.msra.mxu0 0.0
    %788 = vmatprep.subr.mxu0 0.0
    %789 = vmatpush2.msra.mxu0 0.0
    %790 = vmatprep.subr.mxu0 0.0
    %791 = vmatpush2.msra.mxu0 0.0
    %792 = vmatprep.subr.mxu0 0.0
    %793 = vmatpush2.msra.mxu0 0.0
    %794 = vmatprep.mubr.f32.mxu0 0.0
    %795 = vmatmul.mubr.f32.gmra.mxu0 %v728
    %v796 = vpop.f32.mrf.mxu0
    %v797 = vadd.f32 0.0, %v796
    %v798 = vpop.f32.mrf.mxu0
    %v799 = vadd.f32 0.0, %v798
    %800 = vdwg.mxu0
    %v801 = vadd.f32 %v723, %v797
    %v802 = vadd.f32 %v724, %v799
    %v803 = vtanh.pop %v801
    %v804 = vtanh.pop %v802
    %v805 = vmul.f32 %v803, 0.5
    %v806 = vadd.f32 %v805, 0.5
    %v807 = vmul.f32 %v804, 0.5
    %v808 = vadd.f32 %v807, 0.5
    %v809 = vmul.f32 %v806, %v720
    %v810 = vmul.f32 %v806, %v804
    %812 = vrot.lane.b32.xlu0 %v810, 64
    %v813 = vpop.permute.xlu0 %812
    %v815 = vadd.f32 %v809, %v813
    %v816 = vtanh.pop %v815
    %v817 = vmul.f32 %v808, %v816
    %v818 = vld [vmem:[#allocation2 + $0x60] sm:$0xff]
    %v819 = vld [vmem:[#allocation2 + $0x68] sm:$0xff]
    %821 = vrot.lane.b32.xlu0 %v817, 64
    %v822 = vpop.permute.xlu0 %821
    %v823 = vsel %vm251, %v822, 0
    %825 = vmatprep.subr.mxu0 0.0
    %826 = vmatpush1.msra.mxu0 0.0
    %827 = vmatprep.subr.mxu0 0.0
    %828 = vmatpush1.msra.mxu0 0.0
    %829 = vmatprep.subr.mxu0 0.0
    %830 = vmatpush1.msra.mxu0 0.0
    %831 = vmatprep.subr.mxu0 0.0
    %832 = vmatpush1.msra.mxu0 0.0
    %833 = vmatprep.subr.mxu0 0.0
    %834 = vmatpush1.msra.mxu0 0.0
    %835 = vmatprep.subr.mxu0 0.0
    %836 = vmatpush1.msra.mxu0 0.0
    %837 = vmatprep.subr.mxu0 0.0
    %838 = vmatpush1.msra.mxu0 0.0
    %839 = vmatprep.subr.mxu0 0.0
    %840 = vmatpush1.msra.mxu0 0.0
    %841 = vmatprep.subr.mxu0 %v250
    %842 = vmatpush1.msra.mxu0 %v249
    %843 = vmatprep.subr.mxu0 %v248
    %844 = vmatpush1.msra.mxu0 %v247
    %845 = vmatprep.subr.mxu0 %v246
    %846 = vmatpush1.msra.mxu0 %v245
    %847 = vmatprep.subr.mxu0 %v244
    %848 = vmatpush1.msra.mxu0 %v243
    %849 = vmatprep.subr.mxu0 %v242
    %850 = vmatpush1.msra.mxu0 %v241
    %851 = vmatprep.subr.mxu0 %v240
    %852 = vmatpush1.msra.mxu0 %v239
    %853 = vmatprep.subr.mxu0 %v238
    %854 = vmatpush1.msra.mxu0 %v237
    %855 = vmatprep.subr.mxu0 %v236
    %856 = vmatpush1.msra.mxu0 %v235
    %857 = vmatprep.subr.mxu0 0.0
    %858 = vmatpush2.msra.mxu0 0.0
    %859 = vmatprep.subr.mxu0 0.0
    %860 = vmatpush2.msra.mxu0 0.0
    %861 = vmatprep.subr.mxu0 0.0
    %862 = vmatpush2.msra.mxu0 0.0
    %863 = vmatprep.subr.mxu0 0.0
    %864 = vmatpush2.msra.mxu0 0.0
    %865 = vmatprep.subr.mxu0 0.0
    %866 = vmatpush2.msra.mxu0 0.0
    %867 = vmatprep.subr.mxu0 0.0
    %868 = vmatpush2.msra.mxu0 0.0
    %869 = vmatprep.subr.mxu0 0.0
    %870 = vmatpush2.msra.mxu0 0.0
    %871 = vmatprep.subr.mxu0 0.0
    %872 = vmatpush2.msra.mxu0 0.0
    %873 = vmatprep.subr.mxu0 0.0
    %874 = vmatpush2.msra.mxu0 0.0
    %875 = vmatprep.subr.mxu0 0.0
    %876 = vmatpush2.msra.mxu0 0.0
    %877 = vmatprep.subr.mxu0 0.0
    %878 = vmatpush2.msra.mxu0 0.0
    %879 = vmatprep.subr.mxu0 0.0
    %880 = vmatpush2.msra.mxu0 0.0
    %881 = vmatprep.subr.mxu0 0.0
    %882 = vmatpush2.msra.mxu0 0.0
    %883 = vmatprep.subr.mxu0 0.0
    %884 = vmatpush2.msra.mxu0 0.0
    %885 = vmatprep.subr.mxu0 0.0
    %886 = vmatpush2.msra.mxu0 0.0
    %887 = vmatprep.subr.mxu0 0.0
    %888 = vmatpush2.msra.mxu0 0.0
    %889 = vmatprep.mubr.f32.mxu0 0.0
    %890 = vmatmul.mubr.f32.gmra.mxu0 %v823
    %v891 = vpop.f32.mrf.mxu0
    %v892 = vadd.f32 0.0, %v891
    %v893 = vpop.f32.mrf.mxu0
    %v894 = vadd.f32 0.0, %v893
    %895 = vdwg.mxu0
    %v896 = vadd.f32 %v818, %v892
    %v897 = vadd.f32 %v819, %v894
    %v898 = vtanh.pop %v896
    %v899 = vtanh.pop %v897
    %v900 = vmul.f32 %v898, 0.5
    %v901 = vadd.f32 %v900, 0.5
    %v902 = vmul.f32 %v899, 0.5
    %v903 = vadd.f32 %v902, 0.5
    %v904 = vmul.f32 %v901, %v815
    %v905 = vmul.f32 %v901, %v899
    %907 = vrot.lane.b32.xlu0 %v905, 64
    %v908 = vpop.permute.xlu0 %907
    %v910 = vadd.f32 %v904, %v908
    %v911 = vtanh.pop %v910
    %v912 = vmul.f32 %v903, %v911
    %v913 = vld [vmem:[#allocation2 + $0x70] sm:$0xff]
    %v914 = vld [vmem:[#allocation2 + $0x78] sm:$0xff]
    %916 = vrot.lane.b32.xlu0 %v912, 64
    %v917 = vpop.permute.xlu0 %916
    %v918 = vsel %vm251, %v917, 0
    %920 = vmatprep.subr.mxu0 0.0
    %921 = vmatpush1.msra.mxu0 0.0
    %922 = vmatprep.subr.mxu0 0.0
    %923 = vmatpush1.msra.mxu0 0.0
    %924 = vmatprep.subr.mxu0 0.0
    %925 = vmatpush1.msra.mxu0 0.0
    %926 = vmatprep.subr.mxu0 0.0
    %927 = vmatpush1.msra.mxu0 0.0
    %928 = vmatprep.subr.mxu0 0.0
    %929 = vmatpush1.msra.mxu0 0.0
    %930 = vmatprep.subr.mxu0 0.0
    %931 = vmatpush1.msra.mxu0 0.0
    %932 = vmatprep.subr.mxu0 0.0
    %933 = vmatpush1.msra.mxu0 0.0
    %934 = vmatprep.subr.mxu0 0.0
    %935 = vmatpush1.msra.mxu0 0.0
    %936 = vmatprep.subr.mxu0 %v250
    %937 = vmatpush1.msra.mxu0 %v249
    %938 = vmatprep.subr.mxu0 %v248
    %939 = vmatpush1.msra.mxu0 %v247
    %940 = vmatprep.subr.mxu0 %v246
    %941 = vmatpush1.msra.mxu0 %v245
    %942 = vmatprep.subr.mxu0 %v244
    %943 = vmatpush1.msra.mxu0 %v243
    %944 = vmatprep.subr.mxu0 %v242
    %945 = vmatpush1.msra.mxu0 %v241
    %946 = vmatprep.subr.mxu0 %v240
    %947 = vmatpush1.msra.mxu0 %v239
    %948 = vmatprep.subr.mxu0 %v238
    %949 = vmatpush1.msra.mxu0 %v237
    %950 = vmatprep.subr.mxu0 %v236
    %951 = vmatpush1.msra.mxu0 %v235
    %952 = vmatprep.subr.mxu0 0.0
    %953 = vmatpush2.msra.mxu0 0.0
    %954 = vmatprep.subr.mxu0 0.0
    %955 = vmatpush2.msra.mxu0 0.0
    %956 = vmatprep.subr.mxu0 0.0
    %957 = vmatpush2.msra.mxu0 0.0
    %958 = vmatprep.subr.mxu0 0.0
    %959 = vmatpush2.msra.mxu0 0.0
    %960 = vmatprep.subr.mxu0 0.0
    %961 = vmatpush2.msra.mxu0 0.0
    %962 = vmatprep.subr.mxu0 0.0
    %963 = vmatpush2.msra.mxu0 0.0
    %964 = vmatprep.subr.mxu0 0.0
    %965 = vmatpush2.msra.mxu0 0.0
    %966 = vmatprep.subr.mxu0 0.0
    %967 = vmatpush2.msra.mxu0 0.0
    %968 = vmatprep.subr.mxu0 0.0
    %969 = vmatpush2.msra.mxu0 0.0
    %970 = vmatprep.subr.mxu0 0.0
    %971 = vmatpush2.msra.mxu0 0.0
    %972 = vmatprep.subr.mxu0 0.0
    %973 = vmatpush2.msra.mxu0 0.0
    %974 = vmatprep.subr.mxu0 0.0
    %975 = vmatpush2.msra.mxu0 0.0
    %976 = vmatprep.subr.mxu0 0.0
    %977 = vmatpush2.msra.mxu0 0.0
    %978 = vmatprep.subr.mxu0 0.0
    %979 = vmatpush2.msra.mxu0 0.0
    %980 = vmatprep.subr.mxu0 0.0
    %981 = vmatpush2.msra.mxu0 0.0
    %982 = vmatprep.subr.mxu0 0.0
    %983 = vmatpush2.msra.mxu0 0.0
    %984 = vmatprep.mubr.f32.mxu0 0.0
    %985 = vmatmul.mubr.f32.gmra.mxu0 %v918
    %v986 = vpop.f32.mrf.mxu0
    %v987 = vadd.f32 0.0, %v986
    %v988 = vpop.f32.mrf.mxu0
    %v989 = vadd.f32 0.0, %v988
    %990 = vdwg.mxu0
    %v991 = vadd.f32 %v913, %v987
    %v992 = vadd.f32 %v914, %v989
    %v993 = vtanh.pop %v991
    %v994 = vtanh.pop %v992
    %v995 = vmul.f32 %v993, 0.5
    %v996 = vadd.f32 %v995, 0.5
    %v997 = vmul.f32 %v994, 0.5
    %v998 = vadd.f32 %v997, 0.5
    %v999 = vmul.f32 %v996, %v910
    %v1000 = vmul.f32 %v996, %v994
    %1002 = vrot.lane.b32.xlu0 %v1000, 64
    %v1003 = vpop.permute.xlu0 %1002
    %v1005 = vadd.f32 %v999, %v1003
    %v1006 = vtanh.pop %v1005
    %v1007 = vmul.f32 %v998, %v1006
    %v1008 = vld [vmem:[#allocation5] sm:$0xff]
    %v1009 = vld [vmem:[#allocation5 + $0x8] sm:$0xff]
    %v1010 = vld [vmem:[#allocation5 + $0x10] sm:$0xff]
    %v1011 = vld [vmem:[#allocation5 + $0x18] sm:$0xff]
    %v1012 = vld [vmem:[#allocation5 + $0x20] sm:$0xff]
    %v1013 = vld [vmem:[#allocation5 + $0x28] sm:$0xff]
    %v1014 = vld [vmem:[#allocation5 + $0x30] sm:$0xff]
    %v1015 = vld [vmem:[#allocation5 + $0x38] sm:$0xff]
    %v1016 = vld [vmem:[%s5] sm:$0x1]
    %v1018 = vlaneseq
    %v1019 = vshrl.u32 %v1018, 7
    %v1020 = vsub.s32 0, %v1019
    %v1021 = vrot.slane %v1016, %v1020
    %1024 = vrot.lane.b32.xlu0 %v1007, 64
    %v1025 = vpop.permute.xlu0 %1024
    %v1026 = vsel %vm251, %v1025, 0
    %1028 = vmatprep.subr.mxu0 0.0
    %1029 = vmatpush1.msra.mxu0 0.0
    %1030 = vmatprep.subr.mxu0 0.0
    %1031 = vmatpush1.msra.mxu0 0.0
    %1032 = vmatprep.subr.mxu0 0.0
    %1033 = vmatpush1.msra.mxu0 0.0
    %1034 = vmatprep.subr.mxu0 0.0
    %1035 = vmatpush1.msra.mxu0 0.0
    %1036 = vmatprep.subr.mxu0 0.0
    %1037 = vmatpush1.msra.mxu0 0.0
    %1038 = vmatprep.subr.mxu0 0.0
    %1039 = vmatpush1.msra.mxu0 0.0
    %1040 = vmatprep.subr.mxu0 0.0
    %1041 = vmatpush1.msra.mxu0 0.0
    %1042 = vmatprep.subr.mxu0 0.0
    %1043 = vmatpush1.msra.mxu0 0.0
    %1044 = vmatprep.subr.mxu0 0.0
    %1045 = vmatpush1.msra.mxu0 %v1015
    %1046 = vmatprep.subr.mxu0 0.0
    %1047 = vmatpush1.msra.mxu0 %v1014
    %1048 = vmatprep.subr.mxu0 0.0
    %1049 = vmatpush1.msra.mxu0 %v1013
    %1050 = vmatprep.subr.mxu0 0.0
    %1051 = vmatpush1.msra.mxu0 %v1012
    %1052 = vmatprep.subr.mxu0 0.0
    %1053 = vmatpush1.msra.mxu0 %v1011
    %1054 = vmatprep.subr.mxu0 0.0
    %1055 = vmatpush1.msra.mxu0 %v1010
    %1056 = vmatprep.subr.mxu0 0.0
    %1057 = vmatpush1.msra.mxu0 %v1009
    %1058 = vmatprep.subr.mxu0 0.0
    %1059 = vmatpush1.msra.mxu0 %v1008
    %1060 = vmatprep.subr.mxu0 0.0
    %1061 = vmatpush2.msra.mxu0 0.0
    %1062 = vmatprep.subr.mxu0 0.0
    %1063 = vmatpush2.msra.mxu0 0.0
    %1064 = vmatprep.subr.mxu0 0.0
    %1065 = vmatpush2.msra.mxu0 0.0
    %1066 = vmatprep.subr.mxu0 0.0
    %1067 = vmatpush2.msra.mxu0 0.0
    %1068 = vmatprep.subr.mxu0 0.0
    %1069 = vmatpush2.msra.mxu0 0.0
    %1070 = vmatprep.subr.mxu0 0.0
    %1071 = vmatpush2.msra.mxu0 0.0
    %1072 = vmatprep.subr.mxu0 0.0
    %1073 = vmatpush2.msra.mxu0 0.0
    %1074 = vmatprep.subr.mxu0 0.0
    %1075 = vmatpush2.msra.mxu0 0.0
    %1076 = vmatprep.subr.mxu0 0.0
    %1077 = vmatpush2.msra.mxu0 0.0
    %1078 = vmatprep.subr.mxu0 0.0
    %1079 = vmatpush2.msra.mxu0 0.0
    %1080 = vmatprep.subr.mxu0 0.0
    %1081 = vmatpush2.msra.mxu0 0.0
    %1082 = vmatprep.subr.mxu0 0.0
    %1083 = vmatpush2.msra.mxu0 0.0
    %1084 = vmatprep.subr.mxu0 0.0
    %1085 = vmatpush2.msra.mxu0 0.0
    %1086 = vmatprep.subr.mxu0 0.0
    %1087 = vmatpush2.msra.mxu0 0.0
    %1088 = vmatprep.subr.mxu0 0.0
    %1089 = vmatpush2.msra.mxu0 0.0
    %1090 = vmatprep.subr.mxu0 0.0
    %1091 = vmatpush2.msra.mxu0 0.0
    %1092 = vmatprep.mubr.f32.mxu0 0.0
    %1093 = vmatmul.mubr.f32.gmra.mxu0 %v1026
    %v1094 = vpop.f32.mrf.mxu0
    %v1095 = vadd.f32 %v1021, %v1094
    %v1096 = vpop.f32.mrf.mxu0
    %1097 = vdwg.mxu0
    %1098 = vst [vmem:[%s6] sm:$0xff] %v1095
    // Predicated region
    $region34: #{rnn_forward.1} parent=1 // pred_check
      _
    $region35: #{rnn_forward.1} parent=1 // pred_check_branch
      %1100 = sbr.rel (0) target = $region37
    $region36: #{rnn_forward.1} parent=1 // pred_region
      _
    $region37: #{rnn_forward.1} parent=1 // pred_fallthru
      _
    // Predicated region
    $region38: #{rnn_forward.1} parent=1 // pred_check
      _
    $region39: #{rnn_forward.1} parent=1 // pred_check_branch
      %1102 = sbr.rel (0) target = $region41
    $region40: #{rnn_forward.1} parent=1 // pred_region
      _
    $region41: #{rnn_forward.1} parent=1 // pred_fallthru
      _
    %1103 = vsyncpa [#allocation4], 1
    %1104 = vsyncpa [#allocation6], 1

</llo_original>
